<compile_context>
chip_gen: v7x
topology: tpu7x:2x2x1
jax: 0.10.0
libtpu: 0.0.40
codegen_flags: <defaults>
</compile_context>

<pallas_src>
import functools

import jax
import jax.numpy as jnp
from jax import lax
from jax.experimental import pallas as pl
from jax.experimental.pallas import tpu as pltpu

IGNORE_INDEX = 255


def _round_up(x, m):
    return ((x + m - 1) // m) * m


# --------------------------------------------------------------------------- #
# in-kernel helpers
# --------------------------------------------------------------------------- #
def _boundary_map(x, region_b):
    """3x3 Sobel magnitude (zero padded, cross-correlation) + min/max normalize.

    `x` must be zero outside the original HxW region and the padded plane must
    contain at least one all-zero row and column, so the circular rolls wrap
    through zeros -- this reproduces conv2d zero padding with no edge masks and
    is independent of the roll direction convention (the gradient sign may
    flip, the magnitude does not).  min/max are restricted to the region.
    """
    hp, wp = x.shape
    # separable Sobel: [1,2,1]^T x [-1,0,1]  and its transpose  (rolls -> XLU)
    sr = pltpu.roll(x, shift=1, axis=0) + 2.0 * x + pltpu.roll(x, shift=hp - 1, axis=0)
    gx = pltpu.roll(sr, shift=1, axis=1) - pltpu.roll(sr, shift=wp - 1, axis=1)
    sc = pltpu.roll(x, shift=1, axis=1) + 2.0 * x + pltpu.roll(x, shift=wp - 1, axis=1)
    gy = pltpu.roll(sc, shift=1, axis=0) - pltpu.roll(sc, shift=hp - 1, axis=0)
    grad = jnp.sqrt(gx * gx + gy * gy)
    gmin = jnp.min(jnp.where(region_b, grad, jnp.float32(3.4e38)))
    gmax = jnp.max(jnp.where(region_b, grad, jnp.float32(-3.4e38)))
    # scalar reciprocal hoisted out of the per-pixel divide; exact (not approx)
    # so the normalised map stays inside [0, 1] on region pixels for log(1 - p).
    return (grad - gmin) * (1.0 / (gmax - gmin + 1e-6))


# --------------------------------------------------------------------------- #
# kernel
# --------------------------------------------------------------------------- #
def _seg_loss_kernel(pred_ref, target_ref, out_ref, m_sc, s_sc, acc_sc, *,
                     num_classes, ignore_index, h_orig, w_orig):
    phase = pl.program_id(0)
    c = pl.program_id(1)
    last_c = num_classes - 1

    x = pred_ref[0].astype(jnp.float32)            # (Hp, Wp) logits of class c

    # ----------------- phase 0: streaming (online) log-sum-exp ----------------
    @pl.when(phase == 0)
    def _():
        @pl.when(c == 0)
        def _():
            m_sc[...] = x
            s_sc[...] = jnp.ones_like(x)
            acc_sc[0] = jnp.float32(0.0)           # CE sum
            acc_sc[1] = jnp.float32(0.0)           # Dice sum
            acc_sc[2] = jnp.float32(0.0)           # Boundary BCE sum

        @pl.when(c > 0)
        def _():
            m_old = m_sc[...]
            m_new = jnp.maximum(m_old, x)
            s_sc[...] = s_sc[...] * jnp.exp(m_old - m_new) + jnp.exp(x - m_new)
            m_sc[...] = m_new

        @pl.when(c == last_c)
        def _():
            # reuse m_sc to hold lse = m + log(s) for phase 1
            m_sc[...] = m_sc[...] + jnp.log(s_sc[...])

    # ----------------- phase 1: per-class CE / Dice / Boundary ----------------
    @pl.when(phase == 1)
    def _():
        shape = x.shape
        # region mask hoisted: built ONCE per class step (not per shift).
        row = lax.broadcasted_iota(jnp.int32, shape, 0)
        col = lax.broadcasted_iota(jnp.int32, shape, 1)
        region_b = (row < h_orig) & (col < w_orig)
        regionf = region_b.astype(jnp.float32)

        tgt = target_ref[...]                                  # (Hp, Wp) int32
        maskf = (tgt != ignore_index).astype(jnp.float32)      # 0 in padding too
        onehot = (tgt == c).astype(jnp.float32)                # 0 at ignored px

        logp = x - m_sc[...]                                   # log softmax[c]
        pi = jnp.exp(logp)                                     # softmax[c]

        # cross entropy: sum of -logp at target pixels (ignored px contribute 0)
        ce_c = jnp.sum(onehot * (-logp))

        # dice (sums restricted to valid pixels; onehot is already 0 elsewhere)
        inter = jnp.sum(pi * onehot)
        s_p = jnp.sum(maskf * pi)
        s_t = jnp.sum(onehot)
        dice_c = 1.0 - (2.0 * inter + 1e-6) / (s_p + s_t + 1e-6)

        # boundary: Sobel maps over the original region, BCE over valid pixels.
        # accumulate the two BCE terms separately to keep fewer planes live.
        tb = _boundary_map(onehot, region_b)           # onehot is 0 in padding
        pb = _boundary_map(pi * regionf, region_b)     # zero probs in padding
        pb = jnp.clip(pb, 0.0, 1.0)                    # out-of-region px may leave [0,1]
        log_p = jnp.maximum(jnp.log(pb), -100.0)       # PyTorch BCE log clamp
        mtb = maskf * tb
        t1 = jnp.sum(mtb * log_p)
        log_1mp = jnp.maximum(jnp.log(1.0 - pb), -100.0)
        t2 = jnp.sum((maskf - mtb) * log_1mp)
        bce_c = -(t1 + t2)

        acc_sc[0] = acc_sc[0] + ce_c
        acc_sc[1] = acc_sc[1] + dice_c
        acc_sc[2] = acc_sc[2] + bce_c

        @pl.when(c == last_c)
        def _():
            n_valid = jnp.sum(maskf)
            inv_n = 1.0 / jnp.maximum(n_valid, 1.0)    # hoisted, guarded
            inv_c = jnp.float32(1.0 / num_classes)
            ce_loss = acc_sc[0] * inv_n
            dice_loss = acc_sc[1] * inv_c
            boundary_loss = acc_sc[2] * inv_n * inv_c
            out_ref[0, 0] = ce_loss + 0.5 * dice_loss + 0.5 * boundary_loss


# --------------------------------------------------------------------------- #
# wrapper
# --------------------------------------------------------------------------- #
def _vmem_limit_bytes(plane_bytes):
    """Per-generation VMEM budget: ~85% of physical capacity."""
    try:
        cap = int(getattr(pltpu.get_tpu_info(), "vmem_capacity_bytes",
                          128 * 1024 * 1024))
    except Exception:
        cap = 128 * 1024 * 1024
    need = 24 * plane_bytes + (2 << 20)
    return int(min(max(need, 32 * 1024 * 1024), int(0.85 * cap)))


def _build_seg_loss_call(C, Hp, Wp, h_orig, w_orig, ignore_index,
                         vmem_limit, buffered_target):
    kernel = functools.partial(_seg_loss_kernel, num_classes=C,
                               ignore_index=ignore_index,
                               h_orig=h_orig, w_orig=w_orig)
    if buffered_target:
        # labels block index is constant across the grid -> no double buffer
        tgt_spec = pl.BlockSpec((Hp, Wp), lambda p, c: (0, 0),
                                pipeline_mode=pl.Buffered(1))
    else:
        tgt_spec = pl.BlockSpec((Hp, Wp), lambda p, c: (0, 0))

    return pl.pallas_call(
        kernel,
        out_shape=jax.ShapeDtypeStruct((1, 1), jnp.float32),
        grid_spec=pltpu.PrefetchScalarGridSpec(
            num_scalar_prefetch=0,
            grid=(2, C),                                       # (phase, class)
            in_specs=[
                pl.BlockSpec((1, Hp, Wp), lambda p, c: (c, 0, 0)),  # one class plane
                tgt_spec,                                           # labels (resident)
            ],
            out_specs=pl.BlockSpec((1, 1), lambda p, c: (0, 0),
                                   memory_space=pltpu.MemorySpace.SMEM),
            scratch_shapes=[
                pltpu.VMEM((Hp, Wp), jnp.float32),   # running max -> lse
                pltpu.VMEM((Hp, Wp), jnp.float32),   # running sum-exp
                pltpu.SMEM((4,), jnp.float32),       # CE / Dice / BCE accumulators
            ],
        ),
        compiler_params=pltpu.CompilerParams(
            dimension_semantics=("arbitrary", "arbitrary"),
            vmem_limit_bytes=vmem_limit,
        ),
    )


_BUFFERED_TARGET_OK = None   # cached: does this JAX accept pl.Buffered(1)?


def segmentation_loss(pred, target, ignore_index=IGNORE_INDEX):
    """pred: (N, C, H, W) float logits (f32 or bf16); target: (N, H, W) int labels.

    N must be 1 (see header).  bf16 pred halves HBM DMA bytes; the kernel
    upcasts per class block.
    """
    global _BUFFERED_TARGET_OK
    N, C, H, W = pred.shape
    assert N == 1, "reference BoundaryLoss conv2d only type-checks for batch size 1"

    # Lane-dense padding with >= 1 all-zero row/column so Sobel rolls wrap
    # through zeros.  Padded logits = 0 (finite lse); padded labels =
    # ignore_index so every masked sum ignores them.
    Hp = _round_up(H + 1, 8)
    Wp = _round_up(W + 1, 128)
    pred3 = jnp.pad(pred[0], ((0, 0), (0, Hp - H), (0, Wp - W)))       # native dtype
    tgt2 = jnp.pad(target[0].astype(jnp.int32), ((0, Hp - H), (0, Wp - W)),
                   constant_values=ignore_index)

    vmem_limit = _vmem_limit_bytes(Hp * Wp * 4)

    def run(buffered):
        return _build_seg_loss_call(C, Hp, Wp, H, W, ignore_index,
                                    vmem_limit, buffered)(pred3, tgt2)

    if _BUFFERED_TARGET_OK is None:
        try:
            out = jax.block_until_ready(run(True))
            _BUFFERED_TARGET_OK = True
        except Exception:
            # TODO(synk): drop once pl.Buffered(1) is guaranteed by the minimum JAX.
            _BUFFERED_TARGET_OK = False
            out = run(False)
    else:
        out = run(_BUFFERED_TARGET_OK)
    return out[0, 0]


# ----------------------- pure-JAX reference (for verification) ---------------
def _boundary_ref(x):
    sob_x = jnp.array([[-1., 0., 1.], [-2., 0., 2.], [-1., 0., 1.]], jnp.float32)
    sob_y = jnp.array([[-1., -2., -1.], [0., 0., 0.], [1., 2., 1.]], jnp.float32)
    H, W = x.shape
    xp = jnp.pad(x, ((1, 1), (1, 1)))
    gx = jnp.zeros_like(x)
    gy = jnp.zeros_like(x)
    for i in range(3):
        for j in range(3):
            win = xp[i:i + H, j:j + W]
            gx = gx + sob_x[i, j] * win
            gy = gy + sob_y[i, j] * win
    g = jnp.sqrt(gx * gx + gy * gy)
    return (g - g.min()) / (g.max() - g.min() + 1e-6)


def segmentation_loss_ref(pred, target, ignore_index=IGNORE_INDEX):
    N, C, H, W = pred.shape
    logits = pred[0].astype(jnp.float32)
    tgt = target[0].astype(jnp.int32)
    logp = jax.nn.log_softmax(logits, axis=0)
    prob = jnp.exp(logp)
    maskf = (tgt != ignore_index).astype(jnp.float32)
    nval = maskf.sum()
    ce_pp = jnp.zeros((H, W), jnp.float32)
    dice_loss = 0.0
    boundary_loss = 0.0
    for c in range(C):
        onehot = (tgt == c).astype(jnp.float32)
        pi = prob[c]
        ce_pp = ce_pp + onehot * logp[c]
        inter = (maskf * pi * onehot).sum()
        dice = (2.0 * inter + 1e-6) / ((maskf * pi).sum() + (maskf * onehot).sum() + 1e-6)
        dice_loss += 1.0 - dice
        pb = _boundary_ref(pi)
        tb = _boundary_ref(onehot)
        lp = jnp.maximum(jnp.log(pb), -100.0)
        l1p = jnp.maximum(jnp.log(1.0 - pb), -100.0)
        bce = -(tb * lp + (1.0 - tb) * l1p)
        boundary_loss += (maskf * bce).sum() / nval
    ce_loss = (maskf * (-ce_pp)).sum() / nval
    return ce_loss + 0.5 * (dice_loss / C) + 0.5 * (boundary_loss / C)


if __name__ == "__main__":
    key = jax.random.PRNGKey(0)
    k1, k2 = jax.random.split(key)
    N, C, H, W = 1, 4, 16, 16                    # batch must be 1 (see header)
    pred = jax.random.normal(k1, (N, C, H, W), jnp.float32)
    target = jax.random.randint(k2, (N, H, W), 0, C).astype(jnp.int32)
    target = target.at[0, :2, :4].set(IGNORE_INDEX)   # exercise ignore_index masking

    loss = segmentation_loss(pred, target)
    loss = jax.block_until_ready(loss)

    ref = segmentation_loss_ref(pred, target)
    assert bool(jnp.isfinite(loss)), loss
    assert bool(jnp.allclose(loss, ref, rtol=1e-2, atol=1e-2)), (loss, ref)
    print("KERNEL_OK")
</pallas_src>

<mosaic_0001>
module attributes {stable_mosaic.version = 11 : i64} {
  func.func @_seg_loss_kernel(%arg0: i32, %arg1: i32, %arg2: memref<1x24x128xf32, #tpu.memory_space<vmem>>, %arg3: memref<24x128xi32, #tpu.memory_space<vmem>>, %arg4: memref<1x1xf32, #tpu.memory_space<smem>>, %arg5: memref<24x128xf32, #tpu.memory_space<vmem>>, %arg6: memref<24x128xf32, #tpu.memory_space<vmem>>, %arg7: memref<4xf32, #tpu.memory_space<smem>>) attributes {dimension_semantics = [#tpu.dimension_semantics<arbitrary>, #tpu.dimension_semantics<arbitrary>], iteration_bounds = array<i64: 2, 4>, scalar_prefetch = 0 : i64, scratch_operands = 3 : i64, tpu.core_type = #tpu.core_type<tc>, window_params = [{transform_indices = @transform_0, window_bounds = array<i64: 1, 24, 128>}, {pipeline_mode = #tpu.pipeline_mode<synchronous>, transform_indices = @transform_1, window_bounds = array<i64: 24, 128>}, {transform_indices = @transform_2, window_bounds = array<i64: 1, 1>}]} {
    %c0 = arith.constant 0 : index
    %c0_0 = arith.constant 0 : index
    %c0_1 = arith.constant 0 : index
    %0 = vector.load %arg2[%c0, %c0_0, %c0_1] : memref<1x24x128xf32, #tpu.memory_space<vmem>>, vector<1x24x128xf32>
    %1 = vector.shape_cast %0 : vector<1x24x128xf32> to vector<24x128xf32>
    %c0_i32 = arith.constant 0 : i32
    %2 = arith.cmpi eq, %arg0, %c0_i32 : i32
    %3 = arith.extui %2 : i1 to i32
    %c0_i32_2 = arith.constant 0 : i32
    %4 = arith.cmpi ne, %3, %c0_i32_2 : i32
    scf.if %4 {
      %c0_i32_4 = arith.constant 0 : i32
      %8 = arith.cmpi eq, %arg1, %c0_i32_4 : i32
      %9 = arith.extui %8 : i1 to i32
      %c0_i32_5 = arith.constant 0 : i32
      %10 = arith.cmpi ne, %9, %c0_i32_5 : i32
      scf.if %10 {
        %c0_9 = arith.constant 0 : index
        %c0_10 = arith.constant 0 : index
        %17 = vector.load %arg5[%c0_9, %c0_10] : memref<24x128xf32, #tpu.memory_space<vmem>>, vector<24x128xf32>
        tpu.vector_store %arg5[%c0_9, %c0_10], %1 {strides = array<i32>} : memref<24x128xf32, #tpu.memory_space<vmem>>, vector<24x128xf32>,
        %cst = arith.constant 1.000000e+00 : f32
        %18 = vector.broadcast %cst : f32 to vector<24x128xf32>
        %c0_11 = arith.constant 0 : index
        %c0_12 = arith.constant 0 : index
        %19 = vector.load %arg6[%c0_11, %c0_12] : memref<24x128xf32, #tpu.memory_space<vmem>>, vector<24x128xf32>
        tpu.vector_store %arg6[%c0_11, %c0_12], %18 {strides = array<i32>} : memref<24x128xf32, #tpu.memory_space<vmem>>, vector<24x128xf32>,
        %cst_13 = arith.constant 0.000000e+00 : f32
        %c0_14 = arith.constant 0 : index
        %20 = memref.load %arg7[%c0_14] : memref<4xf32, #tpu.memory_space<smem>>
        memref.store %cst_13, %arg7[%c0_14] : memref<4xf32, #tpu.memory_space<smem>>
        %cst_15 = arith.constant 0.000000e+00 : f32
        %c1 = arith.constant 1 : index
        %21 = memref.load %arg7[%c1] : memref<4xf32, #tpu.memory_space<smem>>
        memref.store %cst_15, %arg7[%c1] : memref<4xf32, #tpu.memory_space<smem>>
        %cst_16 = arith.constant 0.000000e+00 : f32
        %c2 = arith.constant 2 : index
        %22 = memref.load %arg7[%c2] : memref<4xf32, #tpu.memory_space<smem>>
        memref.store %cst_16, %arg7[%c2] : memref<4xf32, #tpu.memory_space<smem>>
      } else {
      }
      %c0_i32_6 = arith.constant 0 : i32
      %11 = arith.cmpi sgt, %arg1, %c0_i32_6 : i32
      %12 = arith.extui %11 : i1 to i32
      %c0_i32_7 = arith.constant 0 : i32
      %13 = arith.cmpi ne, %12, %c0_i32_7 : i32
      scf.if %13 {
        %c0_9 = arith.constant 0 : index
        %c0_10 = arith.constant 0 : index
        %17 = vector.load %arg5[%c0_9, %c0_10] : memref<24x128xf32, #tpu.memory_space<vmem>>, vector<24x128xf32>
        %18 = arith.maximumf %17, %1 : vector<24x128xf32>
        %c0_11 = arith.constant 0 : index
        %c0_12 = arith.constant 0 : index
        %19 = vector.load %arg6[%c0_11, %c0_12] : memref<24x128xf32, #tpu.memory_space<vmem>>, vector<24x128xf32>
        %20 = arith.subf %17, %18 : vector<24x128xf32>
        %21 = math.exp %20 : vector<24x128xf32>
        %22 = arith.mulf %19, %21 : vector<24x128xf32>
        %23 = arith.subf %1, %18 : vector<24x128xf32>
        %24 = math.exp %23 : vector<24x128xf32>
        %25 = arith.addf %22, %24 : vector<24x128xf32>
        %c0_13 = arith.constant 0 : index
        %c0_14 = arith.constant 0 : index
        %26 = vector.load %arg6[%c0_13, %c0_14] : memref<24x128xf32, #tpu.memory_space<vmem>>, vector<24x128xf32>
        tpu.vector_store %arg6[%c0_13, %c0_14], %25 {strides = array<i32>} : memref<24x128xf32, #tpu.memory_space<vmem>>, vector<24x128xf32>,
        %c0_15 = arith.constant 0 : index
        %c0_16 = arith.constant 0 : index
        %27 = vector.load %arg5[%c0_15, %c0_16] : memref<24x128xf32, #tpu.memory_space<vmem>>, vector<24x128xf32>
        tpu.vector_store %arg5[%c0_15, %c0_16], %18 {strides = array<i32>} : memref<24x128xf32, #tpu.memory_space<vmem>>, vector<24x128xf32>,
      } else {
      }
      %c3_i32 = arith.constant 3 : i32
      %14 = arith.cmpi eq, %arg1, %c3_i32 : i32
      %15 = arith.extui %14 : i1 to i32
      %c0_i32_8 = arith.constant 0 : i32
      %16 = arith.cmpi ne, %15, %c0_i32_8 : i32
      scf.if %16 {
        %c0_9 = arith.constant 0 : index
        %c0_10 = arith.constant 0 : index
        %17 = vector.load %arg5[%c0_9, %c0_10] : memref<24x128xf32, #tpu.memory_space<vmem>>, vector<24x128xf32>
        %c0_11 = arith.constant 0 : index
        %c0_12 = arith.constant 0 : index
        %18 = vector.load %arg6[%c0_11, %c0_12] : memref<24x128xf32, #tpu.memory_space<vmem>>, vector<24x128xf32>
        %19 = math.log %18 : vector<24x128xf32>
        %20 = arith.addf %17, %19 : vector<24x128xf32>
        %c0_13 = arith.constant 0 : index
        %c0_14 = arith.constant 0 : index
        %21 = vector.load %arg5[%c0_13, %c0_14] : memref<24x128xf32, #tpu.memory_space<vmem>>, vector<24x128xf32>
        tpu.vector_store %arg5[%c0_13, %c0_14], %20 {strides = array<i32>} : memref<24x128xf32, #tpu.memory_space<vmem>>, vector<24x128xf32>,
      } else {
      }
    } else {
    }
    %c1_i32 = arith.constant 1 : i32
    %5 = arith.cmpi eq, %arg0, %c1_i32 : i32
    %6 = arith.extui %5 : i1 to i32
    %c0_i32_3 = arith.constant 0 : i32
    %7 = arith.cmpi ne, %6, %c0_i32_3 : i32
    scf.if %7 {
      %8 = tpu.iota {dimensions = array<i32: 0>} : vector<24x128xi32>
      %9 = tpu.iota {dimensions = array<i32: 1>} : vector<24x128xi32>
      %c16_i32 = arith.constant 16 : i32
      %10 = vector.broadcast %c16_i32 : i32 to vector<24x128xi32>
      %11 = arith.cmpi slt, %8, %10 : vector<24x128xi32>
      %c16_i32_4 = arith.constant 16 : i32
      %12 = vector.broadcast %c16_i32_4 : i32 to vector<24x128xi32>
      %13 = arith.cmpi slt, %9, %12 : vector<24x128xi32>
      %14 = arith.andi %11, %13 : vector<24x128xi1>
      %15 = arith.extui %14 : vector<24x128xi1> to vector<24x128xi32>
      %16 = arith.sitofp %15 : vector<24x128xi32> to vector<24x128xf32>
      %c0_5 = arith.constant 0 : index
      %c0_6 = arith.constant 0 : index
      %17 = vector.load %arg3[%c0_5, %c0_6] : memref<24x128xi32, #tpu.memory_space<vmem>>, vector<24x128xi32>
      %c255_i32 = arith.constant 255 : i32
      %18 = vector.broadcast %c255_i32 : i32 to vector<24x128xi32>
      %19 = arith.cmpi ne, %17, %18 : vector<24x128xi32>
      %20 = arith.extui %19 : vector<24x128xi1> to vector<24x128xi32>
      %21 = arith.sitofp %20 : vector<24x128xi32> to vector<24x128xf32>
      %22 = vector.broadcast %arg1 : i32 to vector<24x128xi32>
      %23 = arith.cmpi eq, %17, %22 : vector<24x128xi32>
      %24 = arith.extui %23 : vector<24x128xi1> to vector<24x128xi32>
      %25 = arith.sitofp %24 : vector<24x128xi32> to vector<24x128xf32>
      %c0_7 = arith.constant 0 : index
      %c0_8 = arith.constant 0 : index
      %26 = vector.load %arg5[%c0_7, %c0_8] : memref<24x128xf32, #tpu.memory_space<vmem>>, vector<24x128xf32>
      %27 = arith.subf %1, %26 : vector<24x128xf32>
      %28 = math.exp %27 : vector<24x128xf32>
      %cst = arith.constant 0.000000e+00 : f32
      %29 = vector.broadcast %cst : f32 to vector<24x128xf32>
      %30 = arith.subf %29, %27 : vector<24x128xf32>
      %31 = arith.mulf %25, %30 : vector<24x128xf32>
      %32 = vector.shape_cast %31 : vector<24x128xf32> to vector<1x24x128xf32>
      %cst_9 = arith.constant dense<0.000000e+00> : vector<1xf32>
      %33 = vector.multi_reduction <add>, %32, %cst_9 [1, 2] : vector<1x24x128xf32> to vector<1xf32>
      %34 = vector.shape_cast %33 : vector<1xf32> to vector<1x1x1xf32>
      %35 = vector.extract %34[0, 0, 0] : f32 from vector<1x1x1xf32>
      %36 = arith.mulf %28, %25 : vector<24x128xf32>
      %37 = vector.shape_cast %36 : vector<24x128xf32> to vector<1x24x128xf32>
      %cst_10 = arith.constant dense<0.000000e+00> : vector<1xf32>
      %38 = vector.multi_reduction <add>, %37, %cst_10 [1, 2] : vector<1x24x128xf32> to vector<1xf32>
      %39 = vector.shape_cast %38 : vector<1xf32> to vector<1x1x1xf32>
      %40 = vector.extract %39[0, 0, 0] : f32 from vector<1x1x1xf32>
      %41 = arith.mulf %21, %28 : vector<24x128xf32>
      %42 = vector.shape_cast %41 : vector<24x128xf32> to vector<1x24x128xf32>
      %cst_11 = arith.constant dense<0.000000e+00> : vector<1xf32>
      %43 = vector.multi_reduction <add>, %42, %cst_11 [1, 2] : vector<1x24x128xf32> to vector<1xf32>
      %44 = vector.shape_cast %43 : vector<1xf32> to vector<1x1x1xf32>
      %45 = vector.extract %44[0, 0, 0] : f32 from vector<1x1x1xf32>
      %46 = vector.shape_cast %25 : vector<24x128xf32> to vector<1x24x128xf32>
      %cst_12 = arith.constant dense<0.000000e+00> : vector<1xf32>
      %47 = vector.multi_reduction <add>, %46, %cst_12 [1, 2] : vector<1x24x128xf32> to vector<1xf32>
      %48 = vector.shape_cast %47 : vector<1xf32> to vector<1x1x1xf32>
      %49 = vector.extract %48[0, 0, 0] : f32 from vector<1x1x1xf32>
      %cst_13 = arith.constant 2.000000e+00 : f32
      %50 = arith.mulf %cst_13, %40 : f32
      %cst_14 = arith.constant 9.99999997E-7 : f32
      %51 = arith.addf %50, %cst_14 : f32
      %52 = arith.addf %45, %49 : f32
      %cst_15 = arith.constant 9.99999997E-7 : f32
      %53 = arith.addf %52, %cst_15 : f32
      %54 = arith.divf %51, %53 : f32
      %cst_16 = arith.constant 1.000000e+00 : f32
      %55 = arith.subf %cst_16, %54 : f32
      %c1_i32_17 = arith.constant 1 : i32
      %56 = tpu.dynamic_rotate %25 by %c1_i32_17 dim 0 : vector<24x128xf32>, i32 -> vector<24x128xf32>
      %cst_18 = arith.constant 2.000000e+00 : f32
      %57 = vector.broadcast %cst_18 : f32 to vector<24x128xf32>
      %58 = arith.mulf %57, %25 : vector<24x128xf32>
      %59 = arith.addf %56, %58 : vector<24x128xf32>
      %c23_i32 = arith.constant 23 : i32
      %60 = tpu.dynamic_rotate %25 by %c23_i32 dim 0 : vector<24x128xf32>, i32 -> vector<24x128xf32>
      %61 = arith.addf %59, %60 : vector<24x128xf32>
      %c1_i32_19 = arith.constant 1 : i32
      %62 = tpu.dynamic_rotate %61 by %c1_i32_19 dim 1 : vector<24x128xf32>, i32 -> vector<24x128xf32>
      %c127_i32 = arith.constant 127 : i32
      %63 = tpu.dynamic_rotate %61 by %c127_i32 dim 1 : vector<24x128xf32>, i32 -> vector<24x128xf32>
      %64 = arith.subf %62, %63 : vector<24x128xf32>
      %c1_i32_20 = arith.constant 1 : i32
      %65 = tpu.dynamic_rotate %25 by %c1_i32_20 dim 1 : vector<24x128xf32>, i32 -> vector<24x128xf32>
      %cst_21 = arith.constant 2.000000e+00 : f32
      %66 = vector.broadcast %cst_21 : f32 to vector<24x128xf32>
      %67 = arith.mulf %66, %25 : vector<24x128xf32>
      %68 = arith.addf %65, %67 : vector<24x128xf32>
      %c127_i32_22 = arith.constant 127 : i32
      %69 = tpu.dynamic_rotate %25 by %c127_i32_22 dim 1 : vector<24x128xf32>, i32 -> vector<24x128xf32>
      %70 = arith.addf %68, %69 : vector<24x128xf32>
      %c1_i32_23 = arith.constant 1 : i32
      %71 = tpu.dynamic_rotate %70 by %c1_i32_23 dim 0 : vector<24x128xf32>, i32 -> vector<24x128xf32>
      %c23_i32_24 = arith.constant 23 : i32
      %72 = tpu.dynamic_rotate %70 by %c23_i32_24 dim 0 : vector<24x128xf32>, i32 -> vector<24x128xf32>
      %73 = arith.subf %71, %72 : vector<24x128xf32>
      %74 = arith.mulf %64, %64 : vector<24x128xf32>
      %75 = arith.mulf %73, %73 : vector<24x128xf32>
      %76 = arith.addf %74, %75 : vector<24x128xf32>
      %77 = math.sqrt %76 : vector<24x128xf32>
      %cst_25 = arith.constant 3.400000e+38 : f32
      %78 = vector.broadcast %cst_25 : f32 to vector<24x128xf32>
      %79 = arith.select %14, %77, %78 : vector<24x128xi1>, vector<24x128xf32>
      %80 = vector.shape_cast %79 : vector<24x128xf32> to vector<1x24x128xf32>
      %cst_26 = arith.constant dense<0x7F800000> : vector<1xf32>
      %81 = vector.multi_reduction <minimumf>, %80, %cst_26 [1, 2] : vector<1x24x128xf32> to vector<1xf32>
      %82 = vector.shape_cast %81 : vector<1xf32> to vector<1x1x1xf32>
      %83 = vector.extract %82[0, 0, 0] : f32 from vector<1x1x1xf32>
      %cst_27 = arith.constant -3.400000e+38 : f32
      %84 = vector.broadcast %cst_27 : f32 to vector<24x128xf32>
      %85 = arith.select %14, %77, %84 : vector<24x128xi1>, vector<24x128xf32>
      %86 = vector.shape_cast %85 : vector<24x128xf32> to vector<1x24x128xf32>
      %cst_28 = arith.constant dense<0xFF800000> : vector<1xf32>
      %87 = vector.multi_reduction <maximumf>, %86, %cst_28 [1, 2] : vector<1x24x128xf32> to vector<1xf32>
      %88 = vector.shape_cast %87 : vector<1xf32> to vector<1x1x1xf32>
      %89 = vector.extract %88[0, 0, 0] : f32 from vector<1x1x1xf32>
      %90 = vector.broadcast %83 : f32 to vector<24x128xf32>
      %91 = arith.subf %77, %90 : vector<24x128xf32>
      %92 = arith.subf %89, %83 : f32
      %cst_29 = arith.constant 9.99999997E-7 : f32
      %93 = arith.addf %92, %cst_29 : f32
      %cst_30 = arith.constant 1.000000e+00 : f32
      %94 = arith.divf %cst_30, %93 : f32
      %95 = vector.broadcast %94 : f32 to vector<24x128xf32>
      %96 = arith.mulf %91, %95 : vector<24x128xf32>
      %97 = arith.mulf %28, %16 : vector<24x128xf32>
      %c1_i32_31 = arith.constant 1 : i32
      %98 = tpu.dynamic_rotate %97 by %c1_i32_31 dim 0 : vector<24x128xf32>, i32 -> vector<24x128xf32>
      %cst_32 = arith.constant 2.000000e+00 : f32
      %99 = vector.broadcast %cst_32 : f32 to vector<24x128xf32>
      %100 = arith.mulf %99, %97 : vector<24x128xf32>
      %101 = arith.addf %98, %100 : vector<24x128xf32>
      %c23_i32_33 = arith.constant 23 : i32
      %102 = tpu.dynamic_rotate %97 by %c23_i32_33 dim 0 : vector<24x128xf32>, i32 -> vector<24x128xf32>
      %103 = arith.addf %101, %102 : vector<24x128xf32>
      %c1_i32_34 = arith.constant 1 : i32
      %104 = tpu.dynamic_rotate %103 by %c1_i32_34 dim 1 : vector<24x128xf32>, i32 -> vector<24x128xf32>
      %c127_i32_35 = arith.constant 127 : i32
      %105 = tpu.dynamic_rotate %103 by %c127_i32_35 dim 1 : vector<24x128xf32>, i32 -> vector<24x128xf32>
      %106 = arith.subf %104, %105 : vector<24x128xf32>
      %c1_i32_36 = arith.constant 1 : i32
      %107 = tpu.dynamic_rotate %97 by %c1_i32_36 dim 1 : vector<24x128xf32>, i32 -> vector<24x128xf32>
      %cst_37 = arith.constant 2.000000e+00 : f32
      %108 = vector.broadcast %cst_37 : f32 to vector<24x128xf32>
      %109 = arith.mulf %108, %97 : vector<24x128xf32>
      %110 = arith.addf %107, %109 : vector<24x128xf32>
      %c127_i32_38 = arith.constant 127 : i32
      %111 = tpu.dynamic_rotate %97 by %c127_i32_38 dim 1 : vector<24x128xf32>, i32 -> vector<24x128xf32>
      %112 = arith.addf %110, %111 : vector<24x128xf32>
      %c1_i32_39 = arith.constant 1 : i32
      %113 = tpu.dynamic_rotate %112 by %c1_i32_39 dim 0 : vector<24x128xf32>, i32 -> vector<24x128xf32>
      %c23_i32_40 = arith.constant 23 : i32
      %114 = tpu.dynamic_rotate %112 by %c23_i32_40 dim 0 : vector<24x128xf32>, i32 -> vector<24x128xf32>
      %115 = arith.subf %113, %114 : vector<24x128xf32>
      %116 = arith.mulf %106, %106 : vector<24x128xf32>
      %117 = arith.mulf %115, %115 : vector<24x128xf32>
      %118 = arith.addf %116, %117 : vector<24x128xf32>
      %119 = math.sqrt %118 : vector<24x128xf32>
      %cst_41 = arith.constant 3.400000e+38 : f32
      %120 = vector.broadcast %cst_41 : f32 to vector<24x128xf32>
      %121 = arith.select %14, %119, %120 : vector<24x128xi1>, vector<24x128xf32>
      %122 = vector.shape_cast %121 : vector<24x128xf32> to vector<1x24x128xf32>
      %cst_42 = arith.constant dense<0x7F800000> : vector<1xf32>
      %123 = vector.multi_reduction <minimumf>, %122, %cst_42 [1, 2] : vector<1x24x128xf32> to vector<1xf32>
      %124 = vector.shape_cast %123 : vector<1xf32> to vector<1x1x1xf32>
      %125 = vector.extract %124[0, 0, 0] : f32 from vector<1x1x1xf32>
      %cst_43 = arith.constant -3.400000e+38 : f32
      %126 = vector.broadcast %cst_43 : f32 to vector<24x128xf32>
      %127 = arith.select %14, %119, %126 : vector<24x128xi1>, vector<24x128xf32>
      %128 = vector.shape_cast %127 : vector<24x128xf32> to vector<1x24x128xf32>
      %cst_44 = arith.constant dense<0xFF800000> : vector<1xf32>
      %129 = vector.multi_reduction <maximumf>, %128, %cst_44 [1, 2] : vector<1x24x128xf32> to vector<1xf32>
      %130 = vector.shape_cast %129 : vector<1xf32> to vector<1x1x1xf32>
      %131 = vector.extract %130[0, 0, 0] : f32 from vector<1x1x1xf32>
      %132 = vector.broadcast %125 : f32 to vector<24x128xf32>
      %133 = arith.subf %119, %132 : vector<24x128xf32>
      %134 = arith.subf %131, %125 : f32
      %cst_45 = arith.constant 9.99999997E-7 : f32
      %135 = arith.addf %134, %cst_45 : f32
      %cst_46 = arith.constant 1.000000e+00 : f32
      %136 = arith.divf %cst_46, %135 : f32
      %137 = vector.broadcast %136 : f32 to vector<24x128xf32>
      %138 = arith.mulf %133, %137 : vector<24x128xf32>
      %cst_47 = arith.constant 0.000000e+00 : f32
      %cst_48 = arith.constant 1.000000e+00 : f32
      %139 = vector.broadcast %cst_47 : f32 to vector<24x128xf32>
      %140 = arith.maximumf %139, %138 : vector<24x128xf32>
      %141 = vector.broadcast %cst_48 : f32 to vector<24x128xf32>
      %142 = arith.minimumf %141, %140 : vector<24x128xf32>
      %143 = math.log %142 : vector<24x128xf32>
      %cst_49 = arith.constant -1.000000e+02 : f32
      %144 = vector.broadcast %cst_49 : f32 to vector<24x128xf32>
      %145 = arith.maximumf %143, %144 : vector<24x128xf32>
      %146 = arith.mulf %21, %96 : vector<24x128xf32>
      %147 = arith.mulf %146, %145 : vector<24x128xf32>
      %148 = vector.shape_cast %147 : vector<24x128xf32> to vector<1x24x128xf32>
      %cst_50 = arith.constant dense<0.000000e+00> : vector<1xf32>
      %149 = vector.multi_reduction <add>, %148, %cst_50 [1, 2] : vector<1x24x128xf32> to vector<1xf32>
      %150 = vector.shape_cast %149 : vector<1xf32> to vector<1x1x1xf32>
      %151 = vector.extract %150[0, 0, 0] : f32 from vector<1x1x1xf32>
      %cst_51 = arith.constant 1.000000e+00 : f32
      %152 = vector.broadcast %cst_51 : f32 to vector<24x128xf32>
      %153 = arith.subf %152, %142 : vector<24x128xf32>
      %154 = math.log %153 : vector<24x128xf32>
      %cst_52 = arith.constant -1.000000e+02 : f32
      %155 = vector.broadcast %cst_52 : f32 to vector<24x128xf32>
      %156 = arith.maximumf %154, %155 : vector<24x128xf32>
      %157 = arith.subf %21, %146 : vector<24x128xf32>
      %158 = arith.mulf %157, %156 : vector<24x128xf32>
      %159 = vector.shape_cast %158 : vector<24x128xf32> to vector<1x24x128xf32>
      %cst_53 = arith.constant dense<0.000000e+00> : vector<1xf32>
      %160 = vector.multi_reduction <add>, %159, %cst_53 [1, 2] : vector<1x24x128xf32> to vector<1xf32>
      %161 = vector.shape_cast %160 : vector<1xf32> to vector<1x1x1xf32>
      %162 = vector.extract %161[0, 0, 0] : f32 from vector<1x1x1xf32>
      %163 = arith.addf %151, %162 : f32
      %cst_54 = arith.constant 0.000000e+00 : f32
      %164 = arith.subf %cst_54, %163 : f32
      %c0_55 = arith.constant 0 : index
      %165 = memref.load %arg7[%c0_55] : memref<4xf32, #tpu.memory_space<smem>>
      %166 = arith.addf %165, %35 : f32
      %c0_56 = arith.constant 0 : index
      %167 = memref.load %arg7[%c0_56] : memref<4xf32, #tpu.memory_space<smem>>
      memref.store %166, %arg7[%c0_56] : memref<4xf32, #tpu.memory_space<smem>>
      %c1 = arith.constant 1 : index
      %168 = memref.load %arg7[%c1] : memref<4xf32, #tpu.memory_space<smem>>
      %169 = arith.addf %168, %55 : f32
      %c1_57 = arith.constant 1 : index
      %170 = memref.load %arg7[%c1_57] : memref<4xf32, #tpu.memory_space<smem>>
      memref.store %169, %arg7[%c1_57] : memref<4xf32, #tpu.memory_space<smem>>
      %c2 = arith.constant 2 : index
      %171 = memref.load %arg7[%c2] : memref<4xf32, #tpu.memory_space<smem>>
      %172 = arith.addf %171, %164 : f32
      %c2_58 = arith.constant 2 : index
      %173 = memref.load %arg7[%c2_58] : memref<4xf32, #tpu.memory_space<smem>>
      memref.store %172, %arg7[%c2_58] : memref<4xf32, #tpu.memory_space<smem>>
      %c3_i32 = arith.constant 3 : i32
      %174 = arith.cmpi eq, %arg1, %c3_i32 : i32
      %175 = arith.extui %174 : i1 to i32
      %c0_i32_59 = arith.constant 0 : i32
      %176 = arith.cmpi ne, %175, %c0_i32_59 : i32
      scf.if %176 {
        %177 = vector.shape_cast %21 : vector<24x128xf32> to vector<1x24x128xf32>
        %cst_60 = arith.constant dense<0.000000e+00> : vector<1xf32>
        %178 = vector.multi_reduction <add>, %177, %cst_60 [1, 2] : vector<1x24x128xf32> to vector<1xf32>
        %179 = vector.shape_cast %178 : vector<1xf32> to vector<1x1x1xf32>
        %180 = vector.extract %179[0, 0, 0] : f32 from vector<1x1x1xf32>
        %cst_61 = arith.constant 1.000000e+00 : f32
        %181 = arith.maximumf %180, %cst_61 : f32
        %cst_62 = arith.constant 1.000000e+00 : f32
        %182 = arith.divf %cst_62, %181 : f32
        %c0_63 = arith.constant 0 : index
        %183 = memref.load %arg7[%c0_63] : memref<4xf32, #tpu.memory_space<smem>>
        %184 = arith.mulf %183, %182 : f32
        %c1_64 = arith.constant 1 : index
        %185 = memref.load %arg7[%c1_64] : memref<4xf32, #tpu.memory_space<smem>>
        %cst_65 = arith.constant 2.500000e-01 : f32
        %186 = arith.mulf %185, %cst_65 : f32
        %c2_66 = arith.constant 2 : index
        %187 = memref.load %arg7[%c2_66] : memref<4xf32, #tpu.memory_space<smem>>
        %188 = arith.mulf %187, %182 : f32
        %cst_67 = arith.constant 2.500000e-01 : f32
        %189 = arith.mulf %188, %cst_67 : f32
        %cst_68 = arith.constant 5.000000e-01 : f32
        %190 = arith.mulf %cst_68, %186 : f32
        %191 = arith.addf %184, %190 : f32
        %cst_69 = arith.constant 5.000000e-01 : f32
        %192 = arith.mulf %cst_69, %189 : f32
        %193 = arith.addf %191, %192 : f32
        %c0_70 = arith.constant 0 : index
        %c0_71 = arith.constant 0 : index
        %194 = memref.load %arg4[%c0_70, %c0_71] : memref<1x1xf32, #tpu.memory_space<smem>>
        memref.store %193, %arg4[%c0_70, %c0_71] : memref<1x1xf32, #tpu.memory_space<smem>>
      } else {
      }
    } else {
    }
    return
  }
  func.func @transform_0(%arg0: i32, %arg1: i32) -> (i32, i32, i32) {
    %c0_i32 = arith.constant 0 : i32
    %c0_i32_0 = arith.constant 0 : i32
    %c0_i32_1 = arith.constant 0 : i32
    return %arg1, %c0_i32, %c0_i32_0 : i32, i32, i32
  }
  func.func @transform_1(%arg0: i32, %arg1: i32) -> (i32, i32) {
    %c0_i32 = arith.constant 0 : i32
    %c0_i32_0 = arith.constant 0 : i32
    %c0_i32_1 = arith.constant 0 : i32
    return %c0_i32, %c0_i32_0 : i32, i32
  }
  func.func @transform_2(%arg0: i32, %arg1: i32) -> (i32, i32) {
    %c0_i32 = arith.constant 0 : i32
    %c0_i32_0 = arith.constant 0 : i32
    %c0_i32_1 = arith.constant 0 : i32
    return %c0_i32, %c0_i32_0 : i32, i32
  }
}

module attributes {stable_mosaic.version = 11 : i64} {
  func.func @_seg_loss_kernel(%arg0: i32, %arg1: i32, %arg2: memref<1x24x128xf32, #tpu.memory_space<vmem>>, %arg3: memref<24x128xi32, #tpu.memory_space<vmem>>, %arg4: memref<1x1xf32, #tpu.memory_space<smem>>, %arg5: memref<24x128xf32, #tpu.memory_space<vmem>>, %arg6: memref<24x128xf32, #tpu.memory_space<vmem>>, %arg7: memref<4xf32, #tpu.memory_space<smem>>) attributes {dimension_semantics = [#tpu.dimension_semantics<arbitrary>, #tpu.dimension_semantics<arbitrary>], iteration_bounds = array<i64: 2, 4>, scalar_prefetch = 0 : i64, scratch_operands = 3 : i64, tpu.core_type = #tpu.core_type<tc>, window_params = [{transform_indices = @transform_0, window_bounds = array<i64: 1, 24, 128>}, {pipeline_mode = #tpu.pipeline_mode<synchronous>, transform_indices = @transform_1, window_bounds = array<i64: 24, 128>}, {transform_indices = @transform_2, window_bounds = array<i64: 1, 1>}]} {
    %c0 = arith.constant 0 : index
    %c0_0 = arith.constant 0 : index
    %c0_1 = arith.constant 0 : index
    %0 = vector.load %arg2[%c0, %c0_0, %c0_1] : memref<1x24x128xf32, #tpu.memory_space<vmem>>, vector<1x24x128xf32>
    %1 = vector.shape_cast %0 : vector<1x24x128xf32> to vector<24x128xf32>
    %c0_i32 = arith.constant 0 : i32
    %2 = arith.cmpi eq, %arg0, %c0_i32 : i32
    %3 = arith.extui %2 : i1 to i32
    %c0_i32_2 = arith.constant 0 : i32
    %4 = arith.cmpi ne, %3, %c0_i32_2 : i32
    scf.if %4 {
      %c0_i32_4 = arith.constant 0 : i32
      %8 = arith.cmpi eq, %arg1, %c0_i32_4 : i32
      %9 = arith.extui %8 : i1 to i32
      %c0_i32_5 = arith.constant 0 : i32
      %10 = arith.cmpi ne, %9, %c0_i32_5 : i32
      scf.if %10 {
        %c0_9 = arith.constant 0 : index
        %c0_10 = arith.constant 0 : index
        %17 = vector.load %arg5[%c0_9, %c0_10] : memref<24x128xf32, #tpu.memory_space<vmem>>, vector<24x128xf32>
        tpu.vector_store %arg5[%c0_9, %c0_10], %1 {strides = array<i32>} : memref<24x128xf32, #tpu.memory_space<vmem>>, vector<24x128xf32>,
        %cst = arith.constant 1.000000e+00 : f32
        %18 = vector.broadcast %cst : f32 to vector<24x128xf32>
        %c0_11 = arith.constant 0 : index
        %c0_12 = arith.constant 0 : index
        %19 = vector.load %arg6[%c0_11, %c0_12] : memref<24x128xf32, #tpu.memory_space<vmem>>, vector<24x128xf32>
        tpu.vector_store %arg6[%c0_11, %c0_12], %18 {strides = array<i32>} : memref<24x128xf32, #tpu.memory_space<vmem>>, vector<24x128xf32>,
        %cst_13 = arith.constant 0.000000e+00 : f32
        %c0_14 = arith.constant 0 : index
        %20 = memref.load %arg7[%c0_14] : memref<4xf32, #tpu.memory_space<smem>>
        memref.store %cst_13, %arg7[%c0_14] : memref<4xf32, #tpu.memory_space<smem>>
        %cst_15 = arith.constant 0.000000e+00 : f32
        %c1 = arith.constant 1 : index
        %21 = memref.load %arg7[%c1] : memref<4xf32, #tpu.memory_space<smem>>
        memref.store %cst_15, %arg7[%c1] : memref<4xf32, #tpu.memory_space<smem>>
        %cst_16 = arith.constant 0.000000e+00 : f32
        %c2 = arith.constant 2 : index
        %22 = memref.load %arg7[%c2] : memref<4xf32, #tpu.memory_space<smem>>
        memref.store %cst_16, %arg7[%c2] : memref<4xf32, #tpu.memory_space<smem>>
      } else {
      }
      %c0_i32_6 = arith.constant 0 : i32
      %11 = arith.cmpi sgt, %arg1, %c0_i32_6 : i32
      %12 = arith.extui %11 : i1 to i32
      %c0_i32_7 = arith.constant 0 : i32
      %13 = arith.cmpi ne, %12, %c0_i32_7 : i32
      scf.if %13 {
        %c0_9 = arith.constant 0 : index
        %c0_10 = arith.constant 0 : index
        %17 = vector.load %arg5[%c0_9, %c0_10] : memref<24x128xf32, #tpu.memory_space<vmem>>, vector<24x128xf32>
        %18 = arith.maximumf %17, %1 : vector<24x128xf32>
        %c0_11 = arith.constant 0 : index
        %c0_12 = arith.constant 0 : index
        %19 = vector.load %arg6[%c0_11, %c0_12] : memref<24x128xf32, #tpu.memory_space<vmem>>, vector<24x128xf32>
        %20 = arith.subf %17, %18 : vector<24x128xf32>
        %21 = math.exp %20 : vector<24x128xf32>
        %22 = arith.mulf %19, %21 : vector<24x128xf32>
        %23 = arith.subf %1, %18 : vector<24x128xf32>
        %24 = math.exp %23 : vector<24x128xf32>
        %25 = arith.addf %22, %24 : vector<24x128xf32>
        %c0_13 = arith.constant 0 : index
        %c0_14 = arith.constant 0 : index
        %26 = vector.load %arg6[%c0_13, %c0_14] : memref<24x128xf32, #tpu.memory_space<vmem>>, vector<24x128xf32>
        tpu.vector_store %arg6[%c0_13, %c0_14], %25 {strides = array<i32>} : memref<24x128xf32, #tpu.memory_space<vmem>>, vector<24x128xf32>,
        %c0_15 = arith.constant 0 : index
        %c0_16 = arith.constant 0 : index
        %27 = vector.load %arg5[%c0_15, %c0_16] : memref<24x128xf32, #tpu.memory_space<vmem>>, vector<24x128xf32>
        tpu.vector_store %arg5[%c0_15, %c0_16], %18 {strides = array<i32>} : memref<24x128xf32, #tpu.memory_space<vmem>>, vector<24x128xf32>,
      } else {
      }
      %c3_i32 = arith.constant 3 : i32
      %14 = arith.cmpi eq, %arg1, %c3_i32 : i32
      %15 = arith.extui %14 : i1 to i32
      %c0_i32_8 = arith.constant 0 : i32
      %16 = arith.cmpi ne, %15, %c0_i32_8 : i32
      scf.if %16 {
        %c0_9 = arith.constant 0 : index
        %c0_10 = arith.constant 0 : index
        %17 = vector.load %arg5[%c0_9, %c0_10] : memref<24x128xf32, #tpu.memory_space<vmem>>, vector<24x128xf32>
        %c0_11 = arith.constant 0 : index
        %c0_12 = arith.constant 0 : index
        %18 = vector.load %arg6[%c0_11, %c0_12] : memref<24x128xf32, #tpu.memory_space<vmem>>, vector<24x128xf32>
        %19 = math.log %18 : vector<24x128xf32>
        %20 = arith.addf %17, %19 : vector<24x128xf32>
        %c0_13 = arith.constant 0 : index
        %c0_14 = arith.constant 0 : index
        %21 = vector.load %arg5[%c0_13, %c0_14] : memref<24x128xf32, #tpu.memory_space<vmem>>, vector<24x128xf32>
        tpu.vector_store %arg5[%c0_13, %c0_14], %20 {strides = array<i32>} : memref<24x128xf32, #tpu.memory_space<vmem>>, vector<24x128xf32>,
      } else {
      }
    } else {
    }
    %c1_i32 = arith.constant 1 : i32
    %5 = arith.cmpi eq, %arg0, %c1_i32 : i32
    %6 = arith.extui %5 : i1 to i32
    %c0_i32_3 = arith.constant 0 : i32
    %7 = arith.cmpi ne, %6, %c0_i32_3 : i32
    scf.if %7 {
      %8 = tpu.iota {dimensions = array<i32: 0>} : vector<24x128xi32>
      %9 = tpu.iota {dimensions = array<i32: 1>} : vector<24x128xi32>
      %c16_i32 = arith.constant 16 : i32
      %10 = vector.broadcast %c16_i32 : i32 to vector<24x128xi32>
      %11 = arith.cmpi slt, %8, %10 : vector<24x128xi32>
      %c16_i32_4 = arith.constant 16 : i32
      %12 = vector.broadcast %c16_i32_4 : i32 to vector<24x128xi32>
      %13 = arith.cmpi slt, %9, %12 : vector<24x128xi32>
      %14 = arith.andi %11, %13 : vector<24x128xi1>
      %15 = arith.extui %14 : vector<24x128xi1> to vector<24x128xi32>
      %16 = arith.sitofp %15 : vector<24x128xi32> to vector<24x128xf32>
      %c0_5 = arith.constant 0 : index
      %c0_6 = arith.constant 0 : index
      %17 = vector.load %arg3[%c0_5, %c0_6] : memref<24x128xi32, #tpu.memory_space<vmem>>, vector<24x128xi32>
      %c255_i32 = arith.constant 255 : i32
      %18 = vector.broadcast %c255_i32 : i32 to vector<24x128xi32>
      %19 = arith.cmpi ne, %17, %18 : vector<24x128xi32>
      %20 = arith.extui %19 : vector<24x128xi1> to vector<24x128xi32>
      %21 = arith.sitofp %20 : vector<24x128xi32> to vector<24x128xf32>
      %22 = vector.broadcast %arg1 : i32 to vector<24x128xi32>
      %23 = arith.cmpi eq, %17, %22 : vector<24x128xi32>
      %24 = arith.extui %23 : vector<24x128xi1> to vector<24x128xi32>
      %25 = arith.sitofp %24 : vector<24x128xi32> to vector<24x128xf32>
      %c0_7 = arith.constant 0 : index
      %c0_8 = arith.constant 0 : index
      %26 = vector.load %arg5[%c0_7, %c0_8] : memref<24x128xf32, #tpu.memory_space<vmem>>, vector<24x128xf32>
      %27 = arith.subf %1, %26 : vector<24x128xf32>
      %28 = math.exp %27 : vector<24x128xf32>
      %cst = arith.constant 0.000000e+00 : f32
      %29 = vector.broadcast %cst : f32 to vector<24x128xf32>
      %30 = arith.subf %29, %27 : vector<24x128xf32>
      %31 = arith.mulf %25, %30 : vector<24x128xf32>
      %32 = vector.shape_cast %31 : vector<24x128xf32> to vector<1x24x128xf32>
      %cst_9 = arith.constant dense<0.000000e+00> : vector<1xf32>
      %33 = vector.multi_reduction <add>, %32, %cst_9 [1, 2] : vector<1x24x128xf32> to vector<1xf32>
      %34 = vector.shape_cast %33 : vector<1xf32> to vector<1x1x1xf32>
      %35 = vector.extract %34[0, 0, 0] : f32 from vector<1x1x1xf32>
      %36 = arith.mulf %28, %25 : vector<24x128xf32>
      %37 = vector.shape_cast %36 : vector<24x128xf32> to vector<1x24x128xf32>
      %cst_10 = arith.constant dense<0.000000e+00> : vector<1xf32>
      %38 = vector.multi_reduction <add>, %37, %cst_10 [1, 2] : vector<1x24x128xf32> to vector<1xf32>
      %39 = vector.shape_cast %38 : vector<1xf32> to vector<1x1x1xf32>
      %40 = vector.extract %39[0, 0, 0] : f32 from vector<1x1x1xf32>
      %41 = arith.mulf %21, %28 : vector<24x128xf32>
      %42 = vector.shape_cast %41 : vector<24x128xf32> to vector<1x24x128xf32>
      %cst_11 = arith.constant dense<0.000000e+00> : vector<1xf32>
      %43 = vector.multi_reduction <add>, %42, %cst_11 [1, 2] : vector<1x24x128xf32> to vector<1xf32>
      %44 = vector.shape_cast %43 : vector<1xf32> to vector<1x1x1xf32>
      %45 = vector.extract %44[0, 0, 0] : f32 from vector<1x1x1xf32>
      %46 = vector.shape_cast %25 : vector<24x128xf32> to vector<1x24x128xf32>
      %cst_12 = arith.constant dense<0.000000e+00> : vector<1xf32>
      %47 = vector.multi_reduction <add>, %46, %cst_12 [1, 2] : vector<1x24x128xf32> to vector<1xf32>
      %48 = vector.shape_cast %47 : vector<1xf32> to vector<1x1x1xf32>
      %49 = vector.extract %48[0, 0, 0] : f32 from vector<1x1x1xf32>
      %cst_13 = arith.constant 2.000000e+00 : f32
      %50 = arith.mulf %cst_13, %40 : f32
      %cst_14 = arith.constant 9.99999997E-7 : f32
      %51 = arith.addf %50, %cst_14 : f32
      %52 = arith.addf %45, %49 : f32
      %cst_15 = arith.constant 9.99999997E-7 : f32
      %53 = arith.addf %52, %cst_15 : f32
      %54 = arith.divf %51, %53 : f32
      %cst_16 = arith.constant 1.000000e+00 : f32
      %55 = arith.subf %cst_16, %54 : f32
      %c1_i32_17 = arith.constant 1 : i32
      %56 = tpu.dynamic_rotate %25 by %c1_i32_17 dim 0 : vector<24x128xf32>, i32 -> vector<24x128xf32>
      %cst_18 = arith.constant 2.000000e+00 : f32
      %57 = vector.broadcast %cst_18 : f32 to vector<24x128xf32>
      %58 = arith.mulf %57, %25 : vector<24x128xf32>
      %59 = arith.addf %56, %58 : vector<24x128xf32>
      %c23_i32 = arith.constant 23 : i32
      %60 = tpu.dynamic_rotate %25 by %c23_i32 dim 0 : vector<24x128xf32>, i32 -> vector<24x128xf32>
      %61 = arith.addf %59, %60 : vector<24x128xf32>
      %c1_i32_19 = arith.constant 1 : i32
      %62 = tpu.dynamic_rotate %61 by %c1_i32_19 dim 1 : vector<24x128xf32>, i32 -> vector<24x128xf32>
      %c127_i32 = arith.constant 127 : i32
      %63 = tpu.dynamic_rotate %61 by %c127_i32 dim 1 : vector<24x128xf32>, i32 -> vector<24x128xf32>
      %64 = arith.subf %62, %63 : vector<24x128xf32>
      %c1_i32_20 = arith.constant 1 : i32
      %65 = tpu.dynamic_rotate %25 by %c1_i32_20 dim 1 : vector<24x128xf32>, i32 -> vector<24x128xf32>
      %cst_21 = arith.constant 2.000000e+00 : f32
      %66 = vector.broadcast %cst_21 : f32 to vector<24x128xf32>
      %67 = arith.mulf %66, %25 : vector<24x128xf32>
      %68 = arith.addf %65, %67 : vector<24x128xf32>
      %c127_i32_22 = arith.constant 127 : i32
      %69 = tpu.dynamic_rotate %25 by %c127_i32_22 dim 1 : vector<24x128xf32>, i32 -> vector<24x128xf32>
      %70 = arith.addf %68, %69 : vector<24x128xf32>
      %c1_i32_23 = arith.constant 1 : i32
      %71 = tpu.dynamic_rotate %70 by %c1_i32_23 dim 0 : vector<24x128xf32>, i32 -> vector<24x128xf32>
      %c23_i32_24 = arith.constant 23 : i32
      %72 = tpu.dynamic_rotate %70 by %c23_i32_24 dim 0 : vector<24x128xf32>, i32 -> vector<24x128xf32>
      %73 = arith.subf %71, %72 : vector<24x128xf32>
      %74 = arith.mulf %64, %64 : vector<24x128xf32>
      %75 = arith.mulf %73, %73 : vector<24x128xf32>
      %76 = arith.addf %74, %75 : vector<24x128xf32>
      %77 = math.sqrt %76 : vector<24x128xf32>
      %cst_25 = arith.constant 3.400000e+38 : f32
      %78 = vector.broadcast %cst_25 : f32 to vector<24x128xf32>
      %79 = arith.select %14, %77, %78 : vector<24x128xi1>, vector<24x128xf32>
      %80 = vector.shape_cast %79 : vector<24x128xf32> to vector<1x24x128xf32>
      %cst_26 = arith.constant dense<0x7F800000> : vector<1xf32>
      %81 = vector.multi_reduction <minimumf>, %80, %cst_26 [1, 2] : vector<1x24x128xf32> to vector<1xf32>
      %82 = vector.shape_cast %81 : vector<1xf32> to vector<1x1x1xf32>
      %83 = vector.extract %82[0, 0, 0] : f32 from vector<1x1x1xf32>
      %cst_27 = arith.constant -3.400000e+38 : f32
      %84 = vector.broadcast %cst_27 : f32 to vector<24x128xf32>
      %85 = arith.select %14, %77, %84 : vector<24x128xi1>, vector<24x128xf32>
      %86 = vector.shape_cast %85 : vector<24x128xf32> to vector<1x24x128xf32>
      %cst_28 = arith.constant dense<0xFF800000> : vector<1xf32>
      %87 = vector.multi_reduction <maximumf>, %86, %cst_28 [1, 2] : vector<1x24x128xf32> to vector<1xf32>
      %88 = vector.shape_cast %87 : vector<1xf32> to vector<1x1x1xf32>
      %89 = vector.extract %88[0, 0, 0] : f32 from vector<1x1x1xf32>
      %90 = vector.broadcast %83 : f32 to vector<24x128xf32>
      %91 = arith.subf %77, %90 : vector<24x128xf32>
      %92 = arith.subf %89, %83 : f32
      %cst_29 = arith.constant 9.99999997E-7 : f32
      %93 = arith.addf %92, %cst_29 : f32
      %cst_30 = arith.constant 1.000000e+00 : f32
      %94 = arith.divf %cst_30, %93 : f32
      %95 = vector.broadcast %94 : f32 to vector<24x128xf32>
      %96 = arith.mulf %91, %95 : vector<24x128xf32>
      %97 = arith.mulf %28, %16 : vector<24x128xf32>
      %c1_i32_31 = arith.constant 1 : i32
      %98 = tpu.dynamic_rotate %97 by %c1_i32_31 dim 0 : vector<24x128xf32>, i32 -> vector<24x128xf32>
      %cst_32 = arith.constant 2.000000e+00 : f32
      %99 = vector.broadcast %cst_32 : f32 to vector<24x128xf32>
      %100 = arith.mulf %99, %97 : vector<24x128xf32>
      %101 = arith.addf %98, %100 : vector<24x128xf32>
      %c23_i32_33 = arith.constant 23 : i32
      %102 = tpu.dynamic_rotate %97 by %c23_i32_33 dim 0 : vector<24x128xf32>, i32 -> vector<24x128xf32>
      %103 = arith.addf %101, %102 : vector<24x128xf32>
      %c1_i32_34 = arith.constant 1 : i32
      %104 = tpu.dynamic_rotate %103 by %c1_i32_34 dim 1 : vector<24x128xf32>, i32 -> vector<24x128xf32>
      %c127_i32_35 = arith.constant 127 : i32
      %105 = tpu.dynamic_rotate %103 by %c127_i32_35 dim 1 : vector<24x128xf32>, i32 -> vector<24x128xf32>
      %106 = arith.subf %104, %105 : vector<24x128xf32>
      %c1_i32_36 = arith.constant 1 : i32
      %107 = tpu.dynamic_rotate %97 by %c1_i32_36 dim 1 : vector<24x128xf32>, i32 -> vector<24x128xf32>
      %cst_37 = arith.constant 2.000000e+00 : f32
      %108 = vector.broadcast %cst_37 : f32 to vector<24x128xf32>
      %109 = arith.mulf %108, %97 : vector<24x128xf32>
      %110 = arith.addf %107, %109 : vector<24x128xf32>
      %c127_i32_38 = arith.constant 127 : i32
      %111 = tpu.dynamic_rotate %97 by %c127_i32_38 dim 1 : vector<24x128xf32>, i32 -> vector<24x128xf32>
      %112 = arith.addf %110, %111 : vector<24x128xf32>
      %c1_i32_39 = arith.constant 1 : i32
      %113 = tpu.dynamic_rotate %112 by %c1_i32_39 dim 0 : vector<24x128xf32>, i32 -> vector<24x128xf32>
      %c23_i32_40 = arith.constant 23 : i32
      %114 = tpu.dynamic_rotate %112 by %c23_i32_40 dim 0 : vector<24x128xf32>, i32 -> vector<24x128xf32>
      %115 = arith.subf %113, %114 : vector<24x128xf32>
      %116 = arith.mulf %106, %106 : vector<24x128xf32>
      %117 = arith.mulf %115, %115 : vector<24x128xf32>
      %118 = arith.addf %116, %117 : vector<24x128xf32>
      %119 = math.sqrt %118 : vector<24x128xf32>
      %cst_41 = arith.constant 3.400000e+38 : f32
      %120 = vector.broadcast %cst_41 : f32 to vector<24x128xf32>
      %121 = arith.select %14, %119, %120 : vector<24x128xi1>, vector<24x128xf32>
      %122 = vector.shape_cast %121 : vector<24x128xf32> to vector<1x24x128xf32>
      %cst_42 = arith.constant dense<0x7F800000> : vector<1xf32>
      %123 = vector.multi_reduction <minimumf>, %122, %cst_42 [1, 2] : vector<1x24x128xf32> to vector<1xf32>
      %124 = vector.shape_cast %123 : vector<1xf32> to vector<1x1x1xf32>
      %125 = vector.extract %124[0, 0, 0] : f32 from vector<1x1x1xf32>
      %cst_43 = arith.constant -3.400000e+38 : f32
      %126 = vector.broadcast %cst_43 : f32 to vector<24x128xf32>
      %127 = arith.select %14, %119, %126 : vector<24x128xi1>, vector<24x128xf32>
      %128 = vector.shape_cast %127 : vector<24x128xf32> to vector<1x24x128xf32>
      %cst_44 = arith.constant dense<0xFF800000> : vector<1xf32>
      %129 = vector.multi_reduction <maximumf>, %128, %cst_44 [1, 2] : vector<1x24x128xf32> to vector<1xf32>
      %130 = vector.shape_cast %129 : vector<1xf32> to vector<1x1x1xf32>
      %131 = vector.extract %130[0, 0, 0] : f32 from vector<1x1x1xf32>
      %132 = vector.broadcast %125 : f32 to vector<24x128xf32>
      %133 = arith.subf %119, %132 : vector<24x128xf32>
      %134 = arith.subf %131, %125 : f32
      %cst_45 = arith.constant 9.99999997E-7 : f32
      %135 = arith.addf %134, %cst_45 : f32
      %cst_46 = arith.constant 1.000000e+00 : f32
      %136 = arith.divf %cst_46, %135 : f32
      %137 = vector.broadcast %136 : f32 to vector<24x128xf32>
      %138 = arith.mulf %133, %137 : vector<24x128xf32>
      %cst_47 = arith.constant 0.000000e+00 : f32
      %cst_48 = arith.constant 1.000000e+00 : f32
      %139 = vector.broadcast %cst_47 : f32 to vector<24x128xf32>
      %140 = arith.maximumf %139, %138 : vector<24x128xf32>
      %141 = vector.broadcast %cst_48 : f32 to vector<24x128xf32>
      %142 = arith.minimumf %141, %140 : vector<24x128xf32>
      %143 = math.log %142 : vector<24x128xf32>
      %cst_49 = arith.constant -1.000000e+02 : f32
      %144 = vector.broadcast %cst_49 : f32 to vector<24x128xf32>
      %145 = arith.maximumf %143, %144 : vector<24x128xf32>
      %146 = arith.mulf %21, %96 : vector<24x128xf32>
      %147 = arith.mulf %146, %145 : vector<24x128xf32>
      %148 = vector.shape_cast %147 : vector<24x128xf32> to vector<1x24x128xf32>
      %cst_50 = arith.constant dense<0.000000e+00> : vector<1xf32>
      %149 = vector.multi_reduction <add>, %148, %cst_50 [1, 2] : vector<1x24x128xf32> to vector<1xf32>
      %150 = vector.shape_cast %149 : vector<1xf32> to vector<1x1x1xf32>
      %151 = vector.extract %150[0, 0, 0] : f32 from vector<1x1x1xf32>
      %cst_51 = arith.constant 1.000000e+00 : f32
      %152 = vector.broadcast %cst_51 : f32 to vector<24x128xf32>
      %153 = arith.subf %152, %142 : vector<24x128xf32>
      %154 = math.log %153 : vector<24x128xf32>
      %cst_52 = arith.constant -1.000000e+02 : f32
      %155 = vector.broadcast %cst_52 : f32 to vector<24x128xf32>
      %156 = arith.maximumf %154, %155 : vector<24x128xf32>
      %157 = arith.subf %21, %146 : vector<24x128xf32>
      %158 = arith.mulf %157, %156 : vector<24x128xf32>
      %159 = vector.shape_cast %158 : vector<24x128xf32> to vector<1x24x128xf32>
      %cst_53 = arith.constant dense<0.000000e+00> : vector<1xf32>
      %160 = vector.multi_reduction <add>, %159, %cst_53 [1, 2] : vector<1x24x128xf32> to vector<1xf32>
      %161 = vector.shape_cast %160 : vector<1xf32> to vector<1x1x1xf32>
      %162 = vector.extract %161[0, 0, 0] : f32 from vector<1x1x1xf32>
      %163 = arith.addf %151, %162 : f32
      %cst_54 = arith.constant 0.000000e+00 : f32
      %164 = arith.subf %cst_54, %163 : f32
      %c0_55 = arith.constant 0 : index
      %165 = memref.load %arg7[%c0_55] : memref<4xf32, #tpu.memory_space<smem>>
      %166 = arith.addf %165, %35 : f32
      %c0_56 = arith.constant 0 : index
      %167 = memref.load %arg7[%c0_56] : memref<4xf32, #tpu.memory_space<smem>>
      memref.store %166, %arg7[%c0_56] : memref<4xf32, #tpu.memory_space<smem>>
      %c1 = arith.constant 1 : index
      %168 = memref.load %arg7[%c1] : memref<4xf32, #tpu.memory_space<smem>>
      %169 = arith.addf %168, %55 : f32
      %c1_57 = arith.constant 1 : index
      %170 = memref.load %arg7[%c1_57] : memref<4xf32, #tpu.memory_space<smem>>
      memref.store %169, %arg7[%c1_57] : memref<4xf32, #tpu.memory_space<smem>>
      %c2 = arith.constant 2 : index
      %171 = memref.load %arg7[%c2] : memref<4xf32, #tpu.memory_space<smem>>
      %172 = arith.addf %171, %164 : f32
      %c2_58 = arith.constant 2 : index
      %173 = memref.load %arg7[%c2_58] : memref<4xf32, #tpu.memory_space<smem>>
      memref.store %172, %arg7[%c2_58] : memref<4xf32, #tpu.memory_space<smem>>
      %c3_i32 = arith.constant 3 : i32
      %174 = arith.cmpi eq, %arg1, %c3_i32 : i32
      %175 = arith.extui %174 : i1 to i32
      %c0_i32_59 = arith.constant 0 : i32
      %176 = arith.cmpi ne, %175, %c0_i32_59 : i32
      scf.if %176 {
        %177 = vector.shape_cast %21 : vector<24x128xf32> to vector<1x24x128xf32>
        %cst_60 = arith.constant dense<0.000000e+00> : vector<1xf32>
        %178 = vector.multi_reduction <add>, %177, %cst_60 [1, 2] : vector<1x24x128xf32> to vector<1xf32>
        %179 = vector.shape_cast %178 : vector<1xf32> to vector<1x1x1xf32>
        %180 = vector.extract %179[0, 0, 0] : f32 from vector<1x1x1xf32>
        %cst_61 = arith.constant 1.000000e+00 : f32
        %181 = arith.maximumf %180, %cst_61 : f32
        %cst_62 = arith.constant 1.000000e+00 : f32
        %182 = arith.divf %cst_62, %181 : f32
        %c0_63 = arith.constant 0 : index
        %183 = memref.load %arg7[%c0_63] : memref<4xf32, #tpu.memory_space<smem>>
        %184 = arith.mulf %183, %182 : f32
        %c1_64 = arith.constant 1 : index
        %185 = memref.load %arg7[%c1_64] : memref<4xf32, #tpu.memory_space<smem>>
        %cst_65 = arith.constant 2.500000e-01 : f32
        %186 = arith.mulf %185, %cst_65 : f32
        %c2_66 = arith.constant 2 : index
        %187 = memref.load %arg7[%c2_66] : memref<4xf32, #tpu.memory_space<smem>>
        %188 = arith.mulf %187, %182 : f32
        %cst_67 = arith.constant 2.500000e-01 : f32
        %189 = arith.mulf %188, %cst_67 : f32
        %cst_68 = arith.constant 5.000000e-01 : f32
        %190 = arith.mulf %cst_68, %186 : f32
        %191 = arith.addf %184, %190 : f32
        %cst_69 = arith.constant 5.000000e-01 : f32
        %192 = arith.mulf %cst_69, %189 : f32
        %193 = arith.addf %191, %192 : f32
        %c0_70 = arith.constant 0 : index
        %c0_71 = arith.constant 0 : index
        %194 = memref.load %arg4[%c0_70, %c0_71] : memref<1x1xf32, #tpu.memory_space<smem>>
        memref.store %193, %arg4[%c0_70, %c0_71] : memref<1x1xf32, #tpu.memory_space<smem>>
      } else {
      }
    } else {
    }
    return
  }
  func.func @transform_0(%arg0: i32, %arg1: i32) -> (i32, i32, i32) {
    %c0_i32 = arith.constant 0 : i32
    %c0_i32_0 = arith.constant 0 : i32
    %c0_i32_1 = arith.constant 0 : i32
    return %arg1, %c0_i32, %c0_i32_0 : i32, i32, i32
  }
  func.func @transform_1(%arg0: i32, %arg1: i32) -> (i32, i32) {
    %c0_i32 = arith.constant 0 : i32
    %c0_i32_0 = arith.constant 0 : i32
    %c0_i32_1 = arith.constant 0 : i32
    return %c0_i32, %c0_i32_0 : i32, i32
  }
  func.func @transform_2(%arg0: i32, %arg1: i32) -> (i32, i32) {
    %c0_i32 = arith.constant 0 : i32
    %c0_i32_0 = arith.constant 0 : i32
    %c0_i32_1 = arith.constant 0 : i32
    return %c0_i32, %c0_i32_0 : i32, i32
  }
}

</mosaic_0001>

<llo_original>
// kernel: tpu_custom_call.1
$region0: #{tpu_custom_call.1}
  #allocation0 [shape = 'u32[]', space=smem, size = 0x4, offset = 0x4, fixed_abs, tag = 'smem constant byte address 0x4 - core index']
  #allocation1 [shape = 'u32[144,128]{1,0:T(1,128)}', space=vmem, size = 0x12000, scoped, tag = 'internal scratch']
  #allocation2 [shape = 'f32[24,128]{1,0:T(8,128)}', space=vmem, size = 0x3000, scoped, tag = 'scratch operand']
  #allocation3 [shape = 'f32[24,128]{1,0:T(8,128)}', space=vmem, size = 0x3000, scoped, tag = 'scratch operand']
  #allocation4 [shape = 'f32[4]{0:T(128)}', space=smem, size = 0x200, scoped, tag = 'scratch operand']
  %s0 = inlined_call_operand.hbm [shape: f32[4,24,128], index: 0, kind: input, shape index: {}]
  %s1 = inlined_call_operand.hbm [shape: s32[24,128], index: 1, kind: input, shape index: {}]
  %s2 = inlined_call_operand.hbm [shape: f32[1,1], index: 2, kind: output, shape index: {}]
  %s3 = sld [smem:[#allocation0]]
  $region73: #{tpu_custom_call.1} parent=0
    _
  %s5 = ssub.s32 1, %s3
  %s6 = scalar_select 0, %s5, %s3
  $region1: #{tpu_custom_call.1} parent=0
    #allocation5 [shape = 'u8[24576]{0}', space=vmem, size = 0x6000, scoped, tag = 'input window, operand 0']
    #allocation6 [shape = 's32[2]{0}', space=sflag, size = 0x8, scoped, tag = 'scoped memory for tpu_custom_call.1']
    #allocation7 [shape = 's32[2]{0}', space=sflag, size = 0x8, scoped, tag = 'scoped memory for tpu_custom_call.1']
    #allocation8 [shape = 'u8[12288]{0}', space=vmem, size = 0x3000, scoped, tag = 'input window, operand 1, single buffered']
    #allocation9 [shape = 's32[1]{0}', space=sflag, size = 0x4, scoped, tag = 'scoped memory for tpu_custom_call.1']
    #allocation10 [shape = 'u8[512]{0}', space=smem, size = 0x200, scoped, tag = 'output window, operand 0, single buffered']
    %7 = vsyncpa [#allocation6], 0
    %s8 = scalar_lea.sflag [#allocation6], 1
    %9 = vsyncpa %s8, 0
    %10 = vsyncpa [#allocation9], 0
    %11 = vsyncpa [#allocation7], 0
    loop: start=0, step=1, limit=10
    $region2: #{tpu_custom_call.1} parent=1 // loop_pre_header
      _
    $region3: #{tpu_custom_call.1} parent=1 // loop_header
      %s13 = sphi 0, %s17
      %p14 = scmp.ge.s32.totalorder %s13, 10
      %s20 = sphi 0, %s32
      %s21 = sphi 0, %s28
      %s22 = sphi 0, %s20
      %s23 = sphi 0, %s21
      %s24 = sphi 0, %s22
      %s25 = sphi 0, %s23
      %s35 = sphi 0, %s37
      %s38 = sphi 0, %s35
      %s39 = sphi 0, %s38
      %s55 = sphi 0, %s39
      %s59 = sphi 0, %s59
      %s61 = sphi 0, %s59
      %s62 = sphi 0, %s61
      %s76 = sphi 0, %s62
      %s80 = sphi 0, %s80
      %s82 = sphi 0, %s80
      %s83 = sphi 0, %s82
      %s97 = sphi 0, %s83
    $region4: #{tpu_custom_call.1} parent=1 // loop_header_branch
      %16 = sbr.rel (%p14) target = $region8
    $region5: #{tpu_custom_call.1} parent=1 // loop_body
      %s18 = ssub.s32 %s13, 1
      %s19 = ssub.s32 %s13, 2
      %s26 = sadd.s32 1, %s21
      %p27 = scmp.ge.s32.totalorder %s26, 4
      %s28 = scalar_select %p27, 0, %s26
      %s29 = sadd.s32 1, %s20
      %s30 = scalar_select %p27, %s29, %s20
      %p31 = scmp.ge.s32.totalorder %s30, 2
      %s32 = scalar_select %p31, 0, %s30
      %s33 = ssub.s32 %s21, %s28
      %p34 = scmp.eq.s32.totalorder %s33, 0
      %s36 = sadd.s32 %s35, 1
      %s37 = scalar_select %p34, %s35, %s36
      %p40 = pneg %p34
      %p41 = scmp.eq.s32.totalorder %s13, 7
      %p42 = por %p40, %p41
      %p43 = scmp.ne.s32.totalorder %s35, %s38
      %p44 = scmp.eq.s32.totalorder %s13, 0
      %p45 = por %p43, %p44
      %p46 = scmp.ne.s32.totalorder %s35, %s38
      %p47 = scmp.eq.s32.totalorder %s18, 7
      %p48 = por %p46, %p47
      %p49 = scmp.ne.s32.totalorder %s38, %s39
      %p50 = scmp.eq.s32.totalorder %s18, 0
      %p51 = por %p49, %p50
      %p52 = scmp.ne.s32.totalorder %s38, %s39
      %p53 = scmp.eq.s32.totalorder %s19, 7
      %p54 = por %p52, %p53
      %p56 = scmp.ne.s32.totalorder %s39, %s55
      %p57 = scmp.eq.s32.totalorder %s19, 0
      %p58 = por %p56, %p57
      %s60 = sadd.s32 %s59, 1
      %p63 = scmp.eq.s32.totalorder %s13, 7
      %p64 = scmp.ne.s32.totalorder %s59, %s61
      %p65 = scmp.eq.s32.totalorder %s13, 0
      %p66 = por %p64, %p65
      %p67 = scmp.ne.s32.totalorder %s59, %s61
      %p68 = scmp.eq.s32.totalorder %s18, 7
      %p69 = por %p67, %p68
      %p70 = scmp.ne.s32.totalorder %s61, %s62
      %p71 = scmp.eq.s32.totalorder %s18, 0
      %p72 = por %p70, %p71
      %p73 = scmp.ne.s32.totalorder %s61, %s62
      %p74 = scmp.eq.s32.totalorder %s19, 7
      %p75 = por %p73, %p74
      %p77 = scmp.ne.s32.totalorder %s62, %s76
      %p78 = scmp.eq.s32.totalorder %s19, 0
      %p79 = por %p77, %p78
      %s81 = sadd.s32 %s80, 1
      %p84 = scmp.eq.s32.totalorder %s13, 7
      %p85 = scmp.ne.s32.totalorder %s80, %s82
      %p86 = scmp.eq.s32.totalorder %s13, 0
      %p87 = por %p85, %p86
      %p88 = scmp.ne.s32.totalorder %s80, %s82
      %p89 = scmp.eq.s32.totalorder %s18, 7
      %p90 = por %p88, %p89
      %p91 = scmp.ne.s32.totalorder %s82, %s83
      %p92 = scmp.eq.s32.totalorder %s18, 0
      %p93 = por %p91, %p92
      %p94 = scmp.ne.s32.totalorder %s82, %s83
      %p95 = scmp.eq.s32.totalorder %s19, 7
      %p96 = por %p94, %p95
      %p98 = scmp.ne.s32.totalorder %s83, %s97
      %p99 = scmp.eq.s32.totalorder %s19, 0
      %p100 = por %p98, %p99
      %p101 = scmp.le.s32.totalorder 1, %s13
      %p102 = scmp.lt.s32.totalorder %s13, 9
      %p103 = pnand %p101, %p102
      %p104 = pneg %p103
      // Predicated region
      $region9: #{tpu_custom_call.1} parent=5 // pred_check
        _
      $region10: #{tpu_custom_call.1} parent=5 // pred_check_branch
        %106 = sbr.rel (%p103) target = $region12
      $region11: #{tpu_custom_call.1} parent=5 // pred_region
        %s107 = ssub.s32 %s13, 1
        // Predicated region
        $region13: #{tpu_custom_call.1} parent=11 // pred_check
          %p108 = pneg %p72
        $region14: #{tpu_custom_call.1} parent=11 // pred_check_branch
          %110 = sbr.rel (%p108) target = $region16
        $region15: #{tpu_custom_call.1} parent=11 // pred_region
          %s112 = ssub.s32 384, 384
          %113 = vsyncadd [#allocation9], %s112
          %s114 = sshll.u32 [#allocation8], 4
          %s115 = int_to_ptr.vmem [resolvable:$true] %s114
          %120 = dma.hbm_to_vmem [thread:$0]  %s1, 384, %s115, [#allocation9], 128, 128, 8
        $region16: #{tpu_custom_call.1} parent=11 // pred_fallthru
          _
      $region12: #{tpu_custom_call.1} parent=5 // pred_fallthru
        _
      %p121 = scmp.lt.s32.totalorder %s13, 8
      // Predicated region
      $region17: #{tpu_custom_call.1} parent=5 // pred_check
        %p122 = pneg %p121
      $region18: #{tpu_custom_call.1} parent=5 // pred_check_branch
        %124 = sbr.rel (%p122) target = $region20
      $region19: #{tpu_custom_call.1} parent=5 // pred_region
        // Predicated region
        $region21: #{tpu_custom_call.1} parent=19 // pred_check
          %p125 = pneg %p45
        $region22: #{tpu_custom_call.1} parent=19 // pred_check_branch
          %127 = sbr.rel (%p125) target = $region24
        $region23: #{tpu_custom_call.1} parent=19 // pred_region
          %s128 = sand.u32 %s35, 1
          %s129 = scalar_lea.sflag [#allocation6], %s128
          %s130 = sand.u32 %s35, 1
          %s131 = smul.addr %s130, 24
          %s132 = scalar_lea.vmem [#allocation5], %s131
          %s134 = ssub.s32 384, 384
          %135 = vsyncadd %s129, %s134
          %s136 = smul.addr %s21, 3
          %s137 = smul.addr %s136, 128
          %s138 = scalar_lea.hbm %s0, %s137
          %s139 = sshll.u32 %s132, 4
          %s140 = int_to_ptr.vmem [resolvable:$true] %s139
          %145 = dma.hbm_to_vmem [thread:$0]  %s138, 384, %s140, %s129, 128, 128, 8
        $region24: #{tpu_custom_call.1} parent=19 // pred_fallthru
          _
      $region20: #{tpu_custom_call.1} parent=5 // pred_fallthru
        _
      %p146 = scmp.le.s32.totalorder 1, %s13
      %p147 = scmp.lt.s32.totalorder %s13, 9
      %p148 = pnand %p146, %p147
      %p149 = pneg %p148
      // Predicated region
      $region25: #{tpu_custom_call.1} parent=5 // pred_check
        _
      $region26: #{tpu_custom_call.1} parent=5 // pred_check_branch
        %151 = sbr.rel (%p148) target = $region28
      $region27: #{tpu_custom_call.1} parent=5 // pred_region
        %s152 = ssub.s32 %s13, 1
        %s153 = sand.u32 %s38, 1
        %s154 = scalar_lea.sflag [#allocation6], %s153
        %s155 = sand.u32 %s38, 1
        %s156 = smul.addr %s155, 24
        %s157 = scalar_lea.vmem [#allocation5], %s156
        // Predicated region
        $region29: #{tpu_custom_call.1} parent=27 // pred_check
          %p158 = pneg %p51
        $region30: #{tpu_custom_call.1} parent=27 // pred_check_branch
          %160 = sbr.rel (%p158) target = $region32
        $region31: #{tpu_custom_call.1} parent=27 // pred_region
          %161 = dma.done %s154, 384
        $region32: #{tpu_custom_call.1} parent=27 // pred_fallthru
          _
        // Predicated region
        $region33: #{tpu_custom_call.1} parent=27 // pred_check
          %p162 = pneg %p72
        $region34: #{tpu_custom_call.1} parent=27 // pred_check_branch
          %164 = sbr.rel (%p162) target = $region36
        $region35: #{tpu_custom_call.1} parent=27 // pred_region
          %165 = dma.done [#allocation9], 384
        $region36: #{tpu_custom_call.1} parent=27 // pred_fallthru
          _
        %s166 = sand.u32 %s38, 1
        %s167 = scalar_lea.sflag [#allocation6], %s166
        %s168 = sand.u32 %s38, 1
        %s169 = smul.addr %s168, 24
        %s170 = scalar_lea.vmem [#allocation5], %s169
        %p171 = pneg %p51
        %p172 = pneg %p48
        %p173 = pneg %p72
        %p174 = pneg %p69
        %p175 = pneg %p93
        %p176 = pneg %p90
        %v177 = vld [vmem:[%s157] sm:$0xff]
        %v178 = vld [vmem:[%s157 + $0x8] sm:$0xff]
        %v179 = vld [vmem:[%s157 + $0x10] sm:$0xff]
        %p180 = scmp.eq.s32.totalorder %s22, 0
        // Predicated region
        $region37: #{tpu_custom_call.1} parent=27 // pred_check
          %p181 = pneg %p180
        $region38: #{tpu_custom_call.1} parent=27 // pred_check_branch
          %183 = sbr.rel (%p181) target = $region40
        $region39: #{tpu_custom_call.1} parent=27 // pred_region
          %p184 = scmp.eq.s32.totalorder %s23, 0
          // Predicated region
          $region41: #{tpu_custom_call.1} parent=39 // pred_check
            %p185 = pneg %p184
          $region42: #{tpu_custom_call.1} parent=39 // pred_check_branch
            %187 = sbr.rel (%p185) target = $region44
          $region43: #{tpu_custom_call.1} parent=39 // pred_region
            %188 = vst [vmem:[#allocation2] sm:$0xff] %v177
            %189 = vst [vmem:[#allocation2 + $0x8] sm:$0xff] %v178
            %190 = vst [vmem:[#allocation2 + $0x10] sm:$0xff] %v179
            %191 = vst [vmem:[#allocation3] sm:$0xff] 1.0
            %192 = vst [vmem:[#allocation3 + $0x8] sm:$0xff] 1.0
            %193 = vst [vmem:[#allocation3 + $0x10] sm:$0xff] 1.0
            %s194 = scalar_lea.smem [#allocation4], 0
            %195 = sst [smem:[%s194]] 0.0
            %s196 = scalar_lea.smem [#allocation4], 1
            %197 = sst [smem:[%s196]] 0.0
            %s198 = scalar_lea.smem [#allocation4], 2
            %199 = sst [smem:[%s198]] 0.0
          $region44: #{tpu_custom_call.1} parent=39 // pred_fallthru
            _
          %p200 = scmp.gt.s32.totalorder %s23, 0
          // Predicated region
          $region45: #{tpu_custom_call.1} parent=39 // pred_check
            %p201 = pneg %p200
          $region46: #{tpu_custom_call.1} parent=39 // pred_check_branch
            %203 = sbr.rel (%p201) target = $region48
          $region47: #{tpu_custom_call.1} parent=39 // pred_region
            %v204 = vld [vmem:[#allocation2] sm:$0xff]
            %v205 = vld [vmem:[#allocation2 + $0x8] sm:$0xff]
            %v206 = vld [vmem:[#allocation2 + $0x10] sm:$0xff]
            %v207 = vmax.f32 %v204, %v177
            %v208 = vmax.f32 %v205, %v178
            %v209 = vmax.f32 %v206, %v179
            %v210 = vld [vmem:[#allocation3] sm:$0xff]
            %v211 = vld [vmem:[#allocation3 + $0x8] sm:$0xff]
            %v212 = vld [vmem:[#allocation3 + $0x10] sm:$0xff]
            %v213 = vsub.f32 %v204, %v207
            %v214 = vsub.f32 %v205, %v208
            %v215 = vsub.f32 %v206, %v209
            %v216 = vmul.f32 %v213, 1.442695
            %v217 = vpow.pop %v216
            %v218 = vmul.f32 %v214, 1.442695
            %v219 = vpow.pop %v218
            %v220 = vmul.f32 %v215, 1.442695
            %v221 = vpow.pop %v220
            %v222 = vmul.f32 %v210, %v217
            %v223 = vmul.f32 %v211, %v219
            %v224 = vmul.f32 %v212, %v221
            %v225 = vsub.f32 %v177, %v207
            %v226 = vsub.f32 %v178, %v208
            %v227 = vsub.f32 %v179, %v209
            %v228 = vmul.f32 %v225, 1.442695
            %v229 = vpow.pop %v228
            %v230 = vmul.f32 %v226, 1.442695
            %v231 = vpow.pop %v230
            %v232 = vmul.f32 %v227, 1.442695
            %v233 = vpow.pop %v232
            %v234 = vadd.f32 %v222, %v229
            %v235 = vadd.f32 %v223, %v231
            %v236 = vadd.f32 %v224, %v233
            %237 = vst [vmem:[#allocation3] sm:$0xff] %v234
            %238 = vst [vmem:[#allocation3 + $0x8] sm:$0xff] %v235
            %239 = vst [vmem:[#allocation3 + $0x10] sm:$0xff] %v236
            %240 = vst [vmem:[#allocation2] sm:$0xff] %v207
            %241 = vst [vmem:[#allocation2 + $0x8] sm:$0xff] %v208
            %242 = vst [vmem:[#allocation2 + $0x10] sm:$0xff] %v209
          $region48: #{tpu_custom_call.1} parent=39 // pred_fallthru
            _
          %p243 = scmp.eq.s32.totalorder %s23, 3
          // Predicated region
          $region49: #{tpu_custom_call.1} parent=39 // pred_check
            %p244 = pneg %p243
          $region50: #{tpu_custom_call.1} parent=39 // pred_check_branch
            %246 = sbr.rel (%p244) target = $region52
          $region51: #{tpu_custom_call.1} parent=39 // pred_region
            %v247 = vld [vmem:[#allocation2] sm:$0xff]
            %v248 = vld [vmem:[#allocation2 + $0x8] sm:$0xff]
            %v249 = vld [vmem:[#allocation2 + $0x10] sm:$0xff]
            %v250 = vld [vmem:[#allocation3] sm:$0xff]
            %v251 = vld [vmem:[#allocation3 + $0x8] sm:$0xff]
            %v252 = vld [vmem:[#allocation3 + $0x10] sm:$0xff]
            %v253 = vlog2.pop %v250
            %v254 = vmul.f32 %v253, 0.6931472
            %v255 = vlog2.pop %v251
            %v256 = vmul.f32 %v255, 0.6931472
            %v257 = vlog2.pop %v252
            %v258 = vmul.f32 %v257, 0.6931472
            %v259 = vadd.f32 %v247, %v254
            %v260 = vadd.f32 %v248, %v256
            %v261 = vadd.f32 %v249, %v258
            %262 = vst [vmem:[#allocation2] sm:$0xff] %v259
            %263 = vst [vmem:[#allocation2 + $0x8] sm:$0xff] %v260
            %264 = vst [vmem:[#allocation2 + $0x10] sm:$0xff] %v261
          $region52: #{tpu_custom_call.1} parent=39 // pred_fallthru
            _
        $region40: #{tpu_custom_call.1} parent=27 // pred_fallthru
          _
        %p265 = scmp.eq.s32.totalorder %s22, 1
        // Predicated region
        $region53: #{tpu_custom_call.1} parent=27 // pred_check
          %p266 = pneg %p265
        $region54: #{tpu_custom_call.1} parent=27 // pred_check_branch
          %268 = sbr.rel (%p266) target = $region56
        $region55: #{tpu_custom_call.1} parent=27 // pred_region
          %v269 = vlaneseq
          %v270 = vshrl.u32 %v269, 7
          %v271 = vadd.s32 %v270, 8
          %v272 = vadd.s32 %v270, 16
          %v273 = vlaneseq
          %v274 = vand.u32 %v273, 127
          %vm275 = vcmp.lt.s32.totalorder %v270, 16
          %vm276 = vcmp.lt.s32.totalorder %v271, 16
          %vm277 = vcmp.lt.s32.totalorder %v272, 16
          %vm278 = vcmp.lt.s32.totalorder %v274, 16
          %vm279 = vmand %vm275, %vm278
          %vm280 = vmand %vm276, %vm278
          %vm281 = vmand %vm277, %vm278
          %v282 = vsel %vm279, 1, 0
          %v283 = vsel %vm280, 1, 0
          %v284 = vsel %vm281, 1, 0
          %v285 = vcvt.s32.f32 %v282
          %v286 = vcvt.s32.f32 %v283
          %v287 = vcvt.s32.f32 %v284
          %v288 = vld [vmem:[#allocation8] sm:$0xff]
          %v289 = vld [vmem:[#allocation8 + $0x8] sm:$0xff]
          %v290 = vld [vmem:[#allocation8 + $0x10] sm:$0xff]
          %vm291 = vcmp.ne.s32.totalorder %v288, 255
          %vm292 = vcmp.ne.s32.totalorder %v289, 255
          %vm293 = vcmp.ne.s32.totalorder %v290, 255
          %v294 = vsel %vm291, 1, 0
          %v295 = vsel %vm292, 1, 0
          %v296 = vsel %vm293, 1, 0
          %v297 = vcvt.s32.f32 %v294
          %v298 = vcvt.s32.f32 %v295
          %v299 = vcvt.s32.f32 %v296
          %v300 = vstv %s23
          %vm301 = vcmp.eq.s32.totalorder %v288, %v300
          %vm302 = vcmp.eq.s32.totalorder %v289, %v300
          %vm303 = vcmp.eq.s32.totalorder %v290, %v300
          %v304 = vsel %vm301, 1, 0
          %v305 = vsel %vm302, 1, 0
          %v306 = vsel %vm303, 1, 0
          %v307 = vcvt.s32.f32 %v304
          %v308 = vcvt.s32.f32 %v305
          %v309 = vcvt.s32.f32 %v306
          %v310 = vld [vmem:[#allocation2] sm:$0xff]
          %v311 = vld [vmem:[#allocation2 + $0x8] sm:$0xff]
          %v312 = vld [vmem:[#allocation2 + $0x10] sm:$0xff]
          %v313 = vsub.f32 %v177, %v310
          %v314 = vsub.f32 %v178, %v311
          %v315 = vsub.f32 %v179, %v312
          %v316 = vmul.f32 %v313, 1.442695
          %v317 = vpow.pop %v316
          %v318 = vmul.f32 %v314, 1.442695
          %v319 = vpow.pop %v318
          %v320 = vmul.f32 %v315, 1.442695
          %v321 = vpow.pop %v320
          %v322 = vsub.f32 0.0, %v313
          %v323 = vsub.f32 0.0, %v314
          %v324 = vsub.f32 0.0, %v315
          %v325 = vmul.f32 %v307, %v322
          %v326 = vmul.f32 %v308, %v323
          %v327 = vmul.f32 %v309, %v324
          %v328 = vadd.f32 %v325, %v326
          %v329 = vadd.f32 %v328, %v327
          %330 = vadd.xlane.f32.xlu0 %v329
          %v331 = vpop.xlane.xlu0 %330
          %v332 = vrot.slane %v331, 4
          %v333 = vadd.f32 %v331, %v332
          %v334 = vrot.slane %v333, 2
          %v335 = vadd.f32 %v333, %v334
          %v336 = vrot.slane %v335, 1
          %v337 = vadd.f32 %v335, %v336
          %s338 = vtos %v337
          %v339 = vmul.f32 %v317, %v307
          %v340 = vmul.f32 %v319, %v308
          %v341 = vmul.f32 %v321, %v309
          %v342 = vadd.f32 %v339, %v340
          %v343 = vadd.f32 %v342, %v341
          %344 = vadd.xlane.f32.xlu0 %v343
          %v345 = vpop.xlane.xlu0 %344
          %v346 = vrot.slane %v345, 4
          %v347 = vadd.f32 %v345, %v346
          %v348 = vrot.slane %v347, 2
          %v349 = vadd.f32 %v347, %v348
          %v350 = vrot.slane %v349, 1
          %v351 = vadd.f32 %v349, %v350
          %s352 = vtos %v351
          %v353 = vmul.f32 %v297, %v317
          %v354 = vmul.f32 %v298, %v319
          %v355 = vmul.f32 %v299, %v321
          %v356 = vadd.f32 %v353, %v354
          %v357 = vadd.f32 %v356, %v355
          %358 = vadd.xlane.f32.xlu0 %v357
          %v359 = vpop.xlane.xlu0 %358
          %v360 = vrot.slane %v359, 4
          %v361 = vadd.f32 %v359, %v360
          %v362 = vrot.slane %v361, 2
          %v363 = vadd.f32 %v361, %v362
          %v364 = vrot.slane %v363, 1
          %v365 = vadd.f32 %v363, %v364
          %s366 = vtos %v365
          %v367 = vadd.f32 %v307, %v308
          %v368 = vadd.f32 %v367, %v309
          %369 = vadd.xlane.f32.xlu0 %v368
          %v370 = vpop.xlane.xlu0 %369
          %v371 = vrot.slane %v370, 4
          %v372 = vadd.f32 %v370, %v371
          %v373 = vrot.slane %v372, 2
          %v374 = vadd.f32 %v372, %v373
          %v375 = vrot.slane %v374, 1
          %v376 = vadd.f32 %v374, %v375
          %s377 = vtos %v376
          %s378 = smul.f32 %s352, 2.0
          %s379 = sadd.f32 %s378, 1e-06
          %s380 = sadd.f32 %s366, %s377
          %s381 = sadd.f32 %s380, 1e-06
          %v382 = vstv %s381
          %v383 = vrcp.pop %v382
          %s384 = vtos %v383
          %s385 = smul.f32 %s379, %s384
          %s386 = ssub.f32 1.0, %s385
          %v387 = vrot.slane %v307, 7
          %v388 = vrot.slane %v308, 7
          %v389 = vrot.slane %v309, 7
          %vm390 = vcmp.lt.s32.totalorder %v270, 1
          %v391 = vsel %vm390, %v388, %v389
          %v392 = vsel %vm390, %v387, %v388
          %v393 = vsel %vm390, %v389, %v387
          %v394 = vmul.f32 %v307, 2.0
          %v395 = vmul.f32 %v308, 2.0
          %v396 = vmul.f32 %v309, 2.0
          %v397 = vadd.f32 %v393, %v394
          %v398 = vadd.f32 %v392, %v395
          %v399 = vadd.f32 %v391, %v396
          %v400 = vrot.slane %v307, 1
          %v401 = vrot.slane %v308, 1
          %v402 = vrot.slane %v309, 1
          %vm403 = vcmp.lt.s32.totalorder %v270, 7
          %v404 = vsel %vm403, %v401, %v402
          %v405 = vsel %vm403, %v400, %v401
          %v406 = vsel %vm403, %v402, %v400
          %v407 = vadd.f32 %v397, %v405
          %v408 = vadd.f32 %v398, %v404
          %v409 = vadd.f32 %v399, %v406
          %410 = vrot.lane.b32.xlu0 %v407, 1
          %v411 = vpop.permute.xlu0 %410
          %412 = vrot.lane.b32.xlu0 %v408, 1
          %v413 = vpop.permute.xlu0 %412
          %414 = vrot.lane.b32.xlu0 %v409, 1
          %v415 = vpop.permute.xlu0 %414
          %416 = vrot.lane.b32.xlu0 %v407, 127
          %v417 = vpop.permute.xlu0 %416
          %418 = vrot.lane.b32.xlu0 %v408, 127
          %v419 = vpop.permute.xlu0 %418
          %420 = vrot.lane.b32.xlu0 %v409, 127
          %v421 = vpop.permute.xlu0 %420
          %v422 = vsub.f32 %v411, %v417
          %v423 = vsub.f32 %v413, %v419
          %v424 = vsub.f32 %v415, %v421
          %425 = vrot.lane.b32.xlu0 %v307, 1
          %v426 = vpop.permute.xlu0 %425
          %427 = vrot.lane.b32.xlu0 %v308, 1
          %v428 = vpop.permute.xlu0 %427
          %429 = vrot.lane.b32.xlu0 %v309, 1
          %v430 = vpop.permute.xlu0 %429
          %v431 = vadd.f32 %v426, %v394
          %v432 = vadd.f32 %v428, %v395
          %v433 = vadd.f32 %v430, %v396
          %434 = vrot.lane.b32.xlu0 %v307, 127
          %v435 = vpop.permute.xlu0 %434
          %436 = vrot.lane.b32.xlu0 %v308, 127
          %v437 = vpop.permute.xlu0 %436
          %438 = vrot.lane.b32.xlu0 %v309, 127
          %v439 = vpop.permute.xlu0 %438
          %v440 = vadd.f32 %v431, %v435
          %v441 = vadd.f32 %v432, %v437
          %v442 = vadd.f32 %v433, %v439
          %v443 = vrot.slane %v440, 7
          %v444 = vrot.slane %v441, 7
          %v445 = vrot.slane %v442, 7
          %v446 = vsel %vm390, %v444, %v445
          %v447 = vsel %vm390, %v443, %v444
          %v448 = vsel %vm390, %v445, %v443
          %v449 = vrot.slane %v440, 1
          %v450 = vrot.slane %v441, 1
          %v451 = vrot.slane %v442, 1
          %v452 = vsel %vm403, %v450, %v451
          %v453 = vsel %vm403, %v449, %v450
          %v454 = vsel %vm403, %v451, %v449
          %v455 = vsub.f32 %v448, %v453
          %v456 = vsub.f32 %v447, %v452
          %v457 = vsub.f32 %v446, %v454
          %v458 = vmul.f32 %v422, %v422
          %v459 = vmul.f32 %v423, %v423
          %v460 = vmul.f32 %v424, %v424
          %v461 = vmul.f32 %v455, %v455
          %v462 = vmul.f32 %v456, %v456
          %v463 = vmul.f32 %v457, %v457
          %v464 = vadd.f32 %v458, %v461
          %v465 = vadd.f32 %v459, %v462
          %v466 = vadd.f32 %v460, %v463
          %v467 = vrsqrt.pop %v464
          %v468 = vmul.f32 %v464, %v467
          %vm469 = vcmp.eq.f32.partialorder %v464, inf
          %v470 = vsel %vm469, %v464, %v468
          %vm471 = vcmp.eq.f32.partialorder %v464, 0.0
          %v472 = vand.u32 %v464, 2147483648
          %v473 = vsel %vm471, %v472, %v470
          %v474 = vrsqrt.pop %v465
          %v475 = vmul.f32 %v465, %v474
          %vm476 = vcmp.eq.f32.partialorder %v465, inf
          %v477 = vsel %vm476, %v465, %v475
          %vm478 = vcmp.eq.f32.partialorder %v465, 0.0
          %v479 = vand.u32 %v465, 2147483648
          %v480 = vsel %vm478, %v479, %v477
          %v481 = vrsqrt.pop %v466
          %v482 = vmul.f32 %v466, %v481
          %vm483 = vcmp.eq.f32.partialorder %v466, inf
          %v484 = vsel %vm483, %v466, %v482
          %vm485 = vcmp.eq.f32.partialorder %v466, 0.0
          %v486 = vand.u32 %v466, 2147483648
          %v487 = vsel %vm485, %v486, %v484
          %v488 = vsel %vm279, %v473, 3.4e+38
          %v489 = vsel %vm280, %v480, 3.4e+38
          %v490 = vsel %vm281, %v487, 3.4e+38
          %v491 = vmin.f32 %v488, %v489
          %v492 = vmin.f32 %v491, %v490
          %493 = vmin.xlane.f32.xlu0 %v492
          %v494 = vpop.xlane.xlu0 %493
          %v495 = vrot.slane %v494, 4
          %v496 = vmin.f32 %v494, %v495
          %v497 = vrot.slane %v496, 2
          %v498 = vmin.f32 %v496, %v497
          %v499 = vrot.slane %v498, 1
          %v500 = vmin.f32 %v498, %v499
          %s501 = vtos %v500
          %v502 = vsel %vm279, %v473, -3.4e+38
          %v503 = vsel %vm280, %v480, -3.4e+38
          %v504 = vsel %vm281, %v487, -3.4e+38
          %v505 = vmax.f32 %v502, %v503
          %v506 = vmax.f32 %v505, %v504
          %507 = vmax.xlane.f32.xlu0 %v506
          %v508 = vpop.xlane.xlu0 %507
          %v509 = vrot.slane %v508, 4
          %v510 = vmax.f32 %v508, %v509
          %v511 = vrot.slane %v510, 2
          %v512 = vmax.f32 %v510, %v511
          %v513 = vrot.slane %v512, 1
          %v514 = vmax.f32 %v512, %v513
          %s515 = vtos %v514
          %v516 = vstv %s501
          %v517 = vsub.f32 %v473, %v516
          %v518 = vsub.f32 %v480, %v516
          %v519 = vsub.f32 %v487, %v516
          %s520 = ssub.f32 %s515, %s501
          %s521 = sadd.f32 %s520, 1e-06
          %v522 = vstv %s521
          %v523 = vrcp.pop %v522
          %s524 = vtos %v523
          %v525 = vstv %s524
          %v526 = vmul.f32 %v517, %v525
          %v527 = vmul.f32 %v518, %v525
          %v528 = vmul.f32 %v519, %v525
          %v529 = vmul.f32 %v317, %v285
          %v530 = vmul.f32 %v319, %v286
          %v531 = vmul.f32 %v321, %v287
          %v532 = vrot.slane %v529, 7
          %v533 = vrot.slane %v530, 7
          %v534 = vrot.slane %v531, 7
          %v535 = vsel %vm390, %v533, %v534
          %v536 = vsel %vm390, %v532, %v533
          %v537 = vsel %vm390, %v534, %v532
          %v538 = vmul.f32 %v529, 2.0
          %v539 = vmul.f32 %v530, 2.0
          %v540 = vmul.f32 %v531, 2.0
          %v541 = vadd.f32 %v537, %v538
          %v542 = vadd.f32 %v536, %v539
          %v543 = vadd.f32 %v535, %v540
          %v544 = vrot.slane %v529, 1
          %v545 = vrot.slane %v530, 1
          %v546 = vrot.slane %v531, 1
          %v547 = vsel %vm403, %v545, %v546
          %v548 = vsel %vm403, %v544, %v545
          %v549 = vsel %vm403, %v546, %v544
          %v550 = vadd.f32 %v541, %v548
          %v551 = vadd.f32 %v542, %v547
          %v552 = vadd.f32 %v543, %v549
          %553 = vrot.lane.b32.xlu0 %v550, 1
          %v554 = vpop.permute.xlu0 %553
          %555 = vrot.lane.b32.xlu0 %v551, 1
          %v556 = vpop.permute.xlu0 %555
          %557 = vrot.lane.b32.xlu0 %v552, 1
          %v558 = vpop.permute.xlu0 %557
          %559 = vrot.lane.b32.xlu0 %v550, 127
          %v560 = vpop.permute.xlu0 %559
          %561 = vrot.lane.b32.xlu0 %v551, 127
          %v562 = vpop.permute.xlu0 %561
          %563 = vrot.lane.b32.xlu0 %v552, 127
          %v564 = vpop.permute.xlu0 %563
          %v565 = vsub.f32 %v554, %v560
          %v566 = vsub.f32 %v556, %v562
          %v567 = vsub.f32 %v558, %v564
          %568 = vrot.lane.b32.xlu0 %v529, 1
          %v569 = vpop.permute.xlu0 %568
          %570 = vrot.lane.b32.xlu0 %v530, 1
          %v571 = vpop.permute.xlu0 %570
          %572 = vrot.lane.b32.xlu0 %v531, 1
          %v573 = vpop.permute.xlu0 %572
          %v574 = vadd.f32 %v569, %v538
          %v575 = vadd.f32 %v571, %v539
          %v576 = vadd.f32 %v573, %v540
          %577 = vrot.lane.b32.xlu0 %v529, 127
          %v578 = vpop.permute.xlu0 %577
          %579 = vrot.lane.b32.xlu0 %v530, 127
          %v580 = vpop.permute.xlu0 %579
          %581 = vrot.lane.b32.xlu0 %v531, 127
          %v582 = vpop.permute.xlu0 %581
          %v583 = vadd.f32 %v574, %v578
          %v584 = vadd.f32 %v575, %v580
          %v585 = vadd.f32 %v576, %v582
          %v586 = vrot.slane %v583, 7
          %v587 = vrot.slane %v584, 7
          %v588 = vrot.slane %v585, 7
          %v589 = vsel %vm390, %v587, %v588
          %v590 = vsel %vm390, %v586, %v587
          %v591 = vsel %vm390, %v588, %v586
          %v592 = vrot.slane %v583, 1
          %v593 = vrot.slane %v584, 1
          %v594 = vrot.slane %v585, 1
          %v595 = vsel %vm403, %v593, %v594
          %v596 = vsel %vm403, %v592, %v593
          %v597 = vsel %vm403, %v594, %v592
          %v598 = vsub.f32 %v591, %v596
          %v599 = vsub.f32 %v590, %v595
          %v600 = vsub.f32 %v589, %v597
          %v601 = vmul.f32 %v565, %v565
          %v602 = vmul.f32 %v566, %v566
          %v603 = vmul.f32 %v567, %v567
          %v604 = vmul.f32 %v598, %v598
          %v605 = vmul.f32 %v599, %v599
          %v606 = vmul.f32 %v600, %v600
          %v607 = vadd.f32 %v601, %v604
          %v608 = vadd.f32 %v602, %v605
          %v609 = vadd.f32 %v603, %v606
          %v610 = vrsqrt.pop %v607
          %v611 = vmul.f32 %v607, %v610
          %vm612 = vcmp.eq.f32.partialorder %v607, inf
          %v613 = vsel %vm612, %v607, %v611
          %vm614 = vcmp.eq.f32.partialorder %v607, 0.0
          %v615 = vand.u32 %v607, 2147483648
          %v616 = vsel %vm614, %v615, %v613
          %v617 = vrsqrt.pop %v608
          %v618 = vmul.f32 %v608, %v617
          %vm619 = vcmp.eq.f32.partialorder %v608, inf
          %v620 = vsel %vm619, %v608, %v618
          %vm621 = vcmp.eq.f32.partialorder %v608, 0.0
          %v622 = vand.u32 %v608, 2147483648
          %v623 = vsel %vm621, %v622, %v620
          %v624 = vrsqrt.pop %v609
          %v625 = vmul.f32 %v609, %v624
          %vm626 = vcmp.eq.f32.partialorder %v609, inf
          %v627 = vsel %vm626, %v609, %v625
          %vm628 = vcmp.eq.f32.partialorder %v609, 0.0
          %v629 = vand.u32 %v609, 2147483648
          %v630 = vsel %vm628, %v629, %v627
          %v631 = vsel %vm279, %v616, 3.4e+38
          %v632 = vsel %vm280, %v623, 3.4e+38
          %v633 = vsel %vm281, %v630, 3.4e+38
          %v634 = vmin.f32 %v631, %v632
          %v635 = vmin.f32 %v634, %v633
          %636 = vmin.xlane.f32.xlu0 %v635
          %v637 = vpop.xlane.xlu0 %636
          %v638 = vrot.slane %v637, 4
          %v639 = vmin.f32 %v637, %v638
          %v640 = vrot.slane %v639, 2
          %v641 = vmin.f32 %v639, %v640
          %v642 = vrot.slane %v641, 1
          %v643 = vmin.f32 %v641, %v642
          %s644 = vtos %v643
          %v645 = vsel %vm279, %v616, -3.4e+38
          %v646 = vsel %vm280, %v623, -3.4e+38
          %v647 = vsel %vm281, %v630, -3.4e+38
          %v648 = vmax.f32 %v645, %v646
          %v649 = vmax.f32 %v648, %v647
          %650 = vmax.xlane.f32.xlu0 %v649
          %v651 = vpop.xlane.xlu0 %650
          %v652 = vrot.slane %v651, 4
          %v653 = vmax.f32 %v651, %v652
          %v654 = vrot.slane %v653, 2
          %v655 = vmax.f32 %v653, %v654
          %v656 = vrot.slane %v655, 1
          %v657 = vmax.f32 %v655, %v656
          %s658 = vtos %v657
          %v659 = vstv %s644
          %v660 = vsub.f32 %v616, %v659
          %v661 = vsub.f32 %v623, %v659
          %v662 = vsub.f32 %v630, %v659
          %s663 = ssub.f32 %s658, %s644
          %s664 = sadd.f32 %s663, 1e-06
          %v665 = vstv %s664
          %v666 = vrcp.pop %v665
          %s667 = vtos %v666
          %v668 = vstv %s667
          %v669 = vmul.f32 %v660, %v668
          %v670 = vmul.f32 %v661, %v668
          %v671 = vmul.f32 %v662, %v668
          %v672 = vmax.f32 %v669, 0.0
          %v673 = vmax.f32 %v670, 0.0
          %v674 = vmax.f32 %v671, 0.0
          %v675 = vmin.f32 %v672, 1.0
          %v676 = vmin.f32 %v673, 1.0
          %v677 = vmin.f32 %v674, 1.0
          %v678 = vlog2.pop %v675
          %v679 = vmul.f32 %v678, 0.6931472
          %v680 = vlog2.pop %v676
          %v681 = vmul.f32 %v680, 0.6931472
          %v682 = vlog2.pop %v677
          %v683 = vmul.f32 %v682, 0.6931472
          %v684 = vmax.f32 %v679, -100.0
          %v685 = vmax.f32 %v681, -100.0
          %v686 = vmax.f32 %v683, -100.0
          %v687 = vmul.f32 %v297, %v526
          %v688 = vmul.f32 %v298, %v527
          %v689 = vmul.f32 %v299, %v528
          %v690 = vmul.f32 %v687, %v684
          %v691 = vmul.f32 %v688, %v685
          %v692 = vmul.f32 %v689, %v686
          %v693 = vadd.f32 %v690, %v691
          %v694 = vadd.f32 %v693, %v692
          %695 = vadd.xlane.f32.xlu0 %v694
          %v696 = vpop.xlane.xlu0 %695
          %v697 = vrot.slane %v696, 4
          %v698 = vadd.f32 %v696, %v697
          %v699 = vrot.slane %v698, 2
          %v700 = vadd.f32 %v698, %v699
          %v701 = vrot.slane %v700, 1
          %v702 = vadd.f32 %v700, %v701
          %s703 = vtos %v702
          %v704 = vsub.f32 1.0, %v675
          %v705 = vsub.f32 1.0, %v676
          %v706 = vsub.f32 1.0, %v677
          %v707 = vlog2.pop %v704
          %v708 = vmul.f32 %v707, 0.6931472
          %v709 = vlog2.pop %v705
          %v710 = vmul.f32 %v709, 0.6931472
          %v711 = vlog2.pop %v706
          %v712 = vmul.f32 %v711, 0.6931472
          %v713 = vmax.f32 %v708, -100.0
          %v714 = vmax.f32 %v710, -100.0
          %v715 = vmax.f32 %v712, -100.0
          %v716 = vsub.f32 %v297, %v687
          %v717 = vsub.f32 %v298, %v688
          %v718 = vsub.f32 %v299, %v689
          %v719 = vmul.f32 %v716, %v713
          %v720 = vmul.f32 %v717, %v714
          %v721 = vmul.f32 %v718, %v715
          %v722 = vadd.f32 %v719, %v720
          %v723 = vadd.f32 %v722, %v721
          %724 = vadd.xlane.f32.xlu0 %v723
          %v725 = vpop.xlane.xlu0 %724
          %v726 = vrot.slane %v725, 4
          %v727 = vadd.f32 %v725, %v726
          %v728 = vrot.slane %v727, 2
          %v729 = vadd.f32 %v727, %v728
          %v730 = vrot.slane %v729, 1
          %v731 = vadd.f32 %v729, %v730
          %s732 = vtos %v731
          %s733 = sadd.f32 %s703, %s732
          %s734 = ssub.f32 0.0, %s733
          %s735 = sld [smem:[#allocation4]]
          %s736 = sadd.f32 %s735, %s338
          %s737 = scalar_lea.smem [#allocation4], 0
          %738 = sst [smem:[%s737]] %s736
          %s739 = sld [smem:[#allocation4 + $0x1]]
          %s740 = sadd.f32 %s739, %s386
          %s741 = scalar_lea.smem [#allocation4], 1
          %742 = sst [smem:[%s741]] %s740
          %s743 = sld [smem:[#allocation4 + $0x2]]
          %s744 = sadd.f32 %s743, %s734
          %s745 = scalar_lea.smem [#allocation4], 2
          %746 = sst [smem:[%s745]] %s744
          %p747 = scmp.eq.s32.totalorder %s23, 3
          // Predicated region
          $region57: #{tpu_custom_call.1} parent=55 // pred_check
            %p748 = pneg %p747
          $region58: #{tpu_custom_call.1} parent=55 // pred_check_branch
            %750 = sbr.rel (%p748) target = $region60
          $region59: #{tpu_custom_call.1} parent=55 // pred_region
            %v751 = vadd.f32 %v297, %v298
            %v752 = vadd.f32 %v751, %v299
            %753 = vadd.xlane.f32.xlu0 %v752
            %v754 = vpop.xlane.xlu0 %753
            %v755 = vrot.slane %v754, 4
            %v756 = vadd.f32 %v754, %v755
            %v757 = vrot.slane %v756, 2
            %v758 = vadd.f32 %v756, %v757
            %v759 = vrot.slane %v758, 1
            %v760 = vadd.f32 %v758, %v759
            %s761 = vtos %v760
            %s762 = smax.f32 %s761, 1.0
            %v763 = vstv %s762
            %v764 = vrcp.pop %v763
            %s765 = vtos %v764
            %s766 = sld [smem:[#allocation4]]
            %s767 = smul.f32 %s766, %s765
            %s768 = sld [smem:[#allocation4 + $0x1]]
            %s769 = smul.f32 %s768, 0.25
            %s770 = sld [smem:[#allocation4 + $0x2]]
            %s771 = smul.f32 %s770, %s765
            %s772 = smul.f32 %s771, 0.25
            %s773 = smul.f32 %s769, 0.5
            %s774 = sadd.f32 %s767, %s773
            %s775 = smul.f32 %s772, 0.5
            %s776 = sadd.f32 %s774, %s775
            %s777 = scalar_lea.smem [#allocation10], 0
            %778 = sst [smem:[%s777]] %s776
          $region60: #{tpu_custom_call.1} parent=55 // pred_fallthru
            _
        $region56: #{tpu_custom_call.1} parent=27 // pred_fallthru
          _
        // Predicated region
        $region61: #{tpu_custom_call.1} parent=27 // pred_check
          %p779 = pneg %p90
        $region62: #{tpu_custom_call.1} parent=27 // pred_check_branch
          %781 = sbr.rel (%p779) target = $region64
        $region63: #{tpu_custom_call.1} parent=27 // pred_region
          %s783 = ssub.s32 16, 16
          %784 = vsyncadd [#allocation7], %s783
          %787 = dma.smem_to_hbm [#allocation10], 16, %s2, [#allocation7]
        $region64: #{tpu_custom_call.1} parent=27 // pred_fallthru
          _
        // Predicated region
        $region65: #{tpu_custom_call.1} parent=27 // pred_check
          %p788 = pneg %p90
        $region66: #{tpu_custom_call.1} parent=27 // pred_check_branch
          %790 = sbr.rel (%p788) target = $region68
        $region67: #{tpu_custom_call.1} parent=27 // pred_region
          %791 = dma.done [#allocation7], 16
        $region68: #{tpu_custom_call.1} parent=27 // pred_fallthru
          _
        %792 = sfence
      $region28: #{tpu_custom_call.1} parent=5 // pred_fallthru
        _
      %p793 = scmp.le.s32.totalorder 2, %s13
      // Predicated region
      $region69: #{tpu_custom_call.1} parent=5 // pred_check
        %p794 = pneg %p793
      $region70: #{tpu_custom_call.1} parent=5 // pred_check_branch
        %796 = sbr.rel (%p794) target = $region72
      $region71: #{tpu_custom_call.1} parent=5 // pred_region
        %s797 = ssub.s32 %s13, 2
      $region72: #{tpu_custom_call.1} parent=5 // pred_fallthru
        _
    $region6: #{tpu_custom_call.1} parent=1 // loop_footer
      %s17 = sadd.s32 1, %s13
    $region7: #{tpu_custom_call.1} parent=1 // loop_footer_branch
      %12 = sbr.rel target = $region3
    $region8: #{tpu_custom_call.1} parent=1 // loop_exit
      _
    %798 = vsyncpa [#allocation6], 1
    %s799 = scalar_lea.sflag [#allocation6], 1
    %800 = vsyncpa %s799, 1
    %801 = vsyncpa [#allocation9], 1
    %802 = vsyncpa [#allocation7], 1
    %s803 = scalar_lea.sflag [#allocation7], 1
    %804 = vsyncpa %s803, 1

// kernel: tpu_custom_call.1
$region0: #{tpu_custom_call.1}
  #allocation0 [shape = 'u32[]', space=smem, size = 0x4, offset = 0x4, fixed_abs, tag = 'smem constant byte address 0x4 - core index']
  #allocation1 [shape = 'u32[144,128]{1,0:T(1,128)}', space=vmem, size = 0x12000, scoped, tag = 'internal scratch']
  #allocation2 [shape = 'f32[24,128]{1,0:T(8,128)}', space=vmem, size = 0x3000, scoped, tag = 'scratch operand']
  #allocation3 [shape = 'f32[24,128]{1,0:T(8,128)}', space=vmem, size = 0x3000, scoped, tag = 'scratch operand']
  #allocation4 [shape = 'f32[4]{0:T(128)}', space=smem, size = 0x200, scoped, tag = 'scratch operand']
  %s0 = inlined_call_operand.hbm [shape: f32[4,24,128], index: 0, kind: input, shape index: {}]
  %s1 = inlined_call_operand.hbm [shape: s32[24,128], index: 1, kind: input, shape index: {}]
  %s2 = inlined_call_operand.hbm [shape: f32[1,1], index: 2, kind: output, shape index: {}]
  %s3 = sld [smem:[#allocation0]]
  $region73: #{tpu_custom_call.1} parent=0
    _
  %s5 = ssub.s32 1, %s3
  %s6 = scalar_select 0, %s5, %s3
  $region1: #{tpu_custom_call.1} parent=0
    #allocation5 [shape = 'u8[24576]{0}', space=vmem, size = 0x6000, scoped, tag = 'input window, operand 0']
    #allocation6 [shape = 's32[2]{0}', space=sflag, size = 0x8, scoped, tag = 'scoped memory for tpu_custom_call.1']
    #allocation7 [shape = 's32[2]{0}', space=sflag, size = 0x8, scoped, tag = 'scoped memory for tpu_custom_call.1']
    #allocation8 [shape = 'u8[12288]{0}', space=vmem, size = 0x3000, scoped, tag = 'input window, operand 1, single buffered']
    #allocation9 [shape = 's32[1]{0}', space=sflag, size = 0x4, scoped, tag = 'scoped memory for tpu_custom_call.1']
    #allocation10 [shape = 'u8[512]{0}', space=smem, size = 0x200, scoped, tag = 'output window, operand 0, single buffered']
    %7 = vsyncpa [#allocation6], 0
    %s8 = scalar_lea.sflag [#allocation6], 1
    %9 = vsyncpa %s8, 0
    %10 = vsyncpa [#allocation9], 0
    %11 = vsyncpa [#allocation7], 0
    loop: start=0, step=1, limit=10
    $region2: #{tpu_custom_call.1} parent=1 // loop_pre_header
      _
    $region3: #{tpu_custom_call.1} parent=1 // loop_header
      %s13 = sphi 0, %s17
      %p14 = scmp.ge.s32.totalorder %s13, 10
      %s20 = sphi 0, %s32
      %s21 = sphi 0, %s28
      %s22 = sphi 0, %s20
      %s23 = sphi 0, %s21
      %s24 = sphi 0, %s22
      %s25 = sphi 0, %s23
      %s35 = sphi 0, %s37
      %s38 = sphi 0, %s35
      %s39 = sphi 0, %s38
      %s55 = sphi 0, %s39
      %s59 = sphi 0, %s59
      %s61 = sphi 0, %s59
      %s62 = sphi 0, %s61
      %s76 = sphi 0, %s62
      %s80 = sphi 0, %s80
      %s82 = sphi 0, %s80
      %s83 = sphi 0, %s82
      %s97 = sphi 0, %s83
    $region4: #{tpu_custom_call.1} parent=1 // loop_header_branch
      %16 = sbr.rel (%p14) target = $region8
    $region5: #{tpu_custom_call.1} parent=1 // loop_body
      %s18 = ssub.s32 %s13, 1
      %s19 = ssub.s32 %s13, 2
      %s26 = sadd.s32 1, %s21
      %p27 = scmp.ge.s32.totalorder %s26, 4
      %s28 = scalar_select %p27, 0, %s26
      %s29 = sadd.s32 1, %s20
      %s30 = scalar_select %p27, %s29, %s20
      %p31 = scmp.ge.s32.totalorder %s30, 2
      %s32 = scalar_select %p31, 0, %s30
      %s33 = ssub.s32 %s21, %s28
      %p34 = scmp.eq.s32.totalorder %s33, 0
      %s36 = sadd.s32 %s35, 1
      %s37 = scalar_select %p34, %s35, %s36
      %p40 = pneg %p34
      %p41 = scmp.eq.s32.totalorder %s13, 7
      %p42 = por %p40, %p41
      %p43 = scmp.ne.s32.totalorder %s35, %s38
      %p44 = scmp.eq.s32.totalorder %s13, 0
      %p45 = por %p43, %p44
      %p46 = scmp.ne.s32.totalorder %s35, %s38
      %p47 = scmp.eq.s32.totalorder %s18, 7
      %p48 = por %p46, %p47
      %p49 = scmp.ne.s32.totalorder %s38, %s39
      %p50 = scmp.eq.s32.totalorder %s18, 0
      %p51 = por %p49, %p50
      %p52 = scmp.ne.s32.totalorder %s38, %s39
      %p53 = scmp.eq.s32.totalorder %s19, 7
      %p54 = por %p52, %p53
      %p56 = scmp.ne.s32.totalorder %s39, %s55
      %p57 = scmp.eq.s32.totalorder %s19, 0
      %p58 = por %p56, %p57
      %s60 = sadd.s32 %s59, 1
      %p63 = scmp.eq.s32.totalorder %s13, 7
      %p64 = scmp.ne.s32.totalorder %s59, %s61
      %p65 = scmp.eq.s32.totalorder %s13, 0
      %p66 = por %p64, %p65
      %p67 = scmp.ne.s32.totalorder %s59, %s61
      %p68 = scmp.eq.s32.totalorder %s18, 7
      %p69 = por %p67, %p68
      %p70 = scmp.ne.s32.totalorder %s61, %s62
      %p71 = scmp.eq.s32.totalorder %s18, 0
      %p72 = por %p70, %p71
      %p73 = scmp.ne.s32.totalorder %s61, %s62
      %p74 = scmp.eq.s32.totalorder %s19, 7
      %p75 = por %p73, %p74
      %p77 = scmp.ne.s32.totalorder %s62, %s76
      %p78 = scmp.eq.s32.totalorder %s19, 0
      %p79 = por %p77, %p78
      %s81 = sadd.s32 %s80, 1
      %p84 = scmp.eq.s32.totalorder %s13, 7
      %p85 = scmp.ne.s32.totalorder %s80, %s82
      %p86 = scmp.eq.s32.totalorder %s13, 0
      %p87 = por %p85, %p86
      %p88 = scmp.ne.s32.totalorder %s80, %s82
      %p89 = scmp.eq.s32.totalorder %s18, 7
      %p90 = por %p88, %p89
      %p91 = scmp.ne.s32.totalorder %s82, %s83
      %p92 = scmp.eq.s32.totalorder %s18, 0
      %p93 = por %p91, %p92
      %p94 = scmp.ne.s32.totalorder %s82, %s83
      %p95 = scmp.eq.s32.totalorder %s19, 7
      %p96 = por %p94, %p95
      %p98 = scmp.ne.s32.totalorder %s83, %s97
      %p99 = scmp.eq.s32.totalorder %s19, 0
      %p100 = por %p98, %p99
      %p101 = scmp.le.s32.totalorder 1, %s13
      %p102 = scmp.lt.s32.totalorder %s13, 9
      %p103 = pnand %p101, %p102
      %p104 = pneg %p103
      // Predicated region
      $region9: #{tpu_custom_call.1} parent=5 // pred_check
        _
      $region10: #{tpu_custom_call.1} parent=5 // pred_check_branch
        %106 = sbr.rel (%p103) target = $region12
      $region11: #{tpu_custom_call.1} parent=5 // pred_region
        %s107 = ssub.s32 %s13, 1
        // Predicated region
        $region13: #{tpu_custom_call.1} parent=11 // pred_check
          %p108 = pneg %p72
        $region14: #{tpu_custom_call.1} parent=11 // pred_check_branch
          %110 = sbr.rel (%p108) target = $region16
        $region15: #{tpu_custom_call.1} parent=11 // pred_region
          %s112 = ssub.s32 384, 384
          %113 = vsyncadd [#allocation9], %s112
          %s114 = sshll.u32 [#allocation8], 4
          %s115 = int_to_ptr.vmem [resolvable:$true] %s114
          %120 = dma.hbm_to_vmem [thread:$0]  %s1, 384, %s115, [#allocation9], 128, 128, 8
        $region16: #{tpu_custom_call.1} parent=11 // pred_fallthru
          _
      $region12: #{tpu_custom_call.1} parent=5 // pred_fallthru
        _
      %p121 = scmp.lt.s32.totalorder %s13, 8
      // Predicated region
      $region17: #{tpu_custom_call.1} parent=5 // pred_check
        %p122 = pneg %p121
      $region18: #{tpu_custom_call.1} parent=5 // pred_check_branch
        %124 = sbr.rel (%p122) target = $region20
      $region19: #{tpu_custom_call.1} parent=5 // pred_region
        // Predicated region
        $region21: #{tpu_custom_call.1} parent=19 // pred_check
          %p125 = pneg %p45
        $region22: #{tpu_custom_call.1} parent=19 // pred_check_branch
          %127 = sbr.rel (%p125) target = $region24
        $region23: #{tpu_custom_call.1} parent=19 // pred_region
          %s128 = sand.u32 %s35, 1
          %s129 = scalar_lea.sflag [#allocation6], %s128
          %s130 = sand.u32 %s35, 1
          %s131 = smul.addr %s130, 24
          %s132 = scalar_lea.vmem [#allocation5], %s131
          %s134 = ssub.s32 384, 384
          %135 = vsyncadd %s129, %s134
          %s136 = smul.addr %s21, 3
          %s137 = smul.addr %s136, 128
          %s138 = scalar_lea.hbm %s0, %s137
          %s139 = sshll.u32 %s132, 4
          %s140 = int_to_ptr.vmem [resolvable:$true] %s139
          %145 = dma.hbm_to_vmem [thread:$0]  %s138, 384, %s140, %s129, 128, 128, 8
        $region24: #{tpu_custom_call.1} parent=19 // pred_fallthru
          _
      $region20: #{tpu_custom_call.1} parent=5 // pred_fallthru
        _
      %p146 = scmp.le.s32.totalorder 1, %s13
      %p147 = scmp.lt.s32.totalorder %s13, 9
      %p148 = pnand %p146, %p147
      %p149 = pneg %p148
      // Predicated region
      $region25: #{tpu_custom_call.1} parent=5 // pred_check
        _
      $region26: #{tpu_custom_call.1} parent=5 // pred_check_branch
        %151 = sbr.rel (%p148) target = $region28
      $region27: #{tpu_custom_call.1} parent=5 // pred_region
        %s152 = ssub.s32 %s13, 1
        %s153 = sand.u32 %s38, 1
        %s154 = scalar_lea.sflag [#allocation6], %s153
        %s155 = sand.u32 %s38, 1
        %s156 = smul.addr %s155, 24
        %s157 = scalar_lea.vmem [#allocation5], %s156
        // Predicated region
        $region29: #{tpu_custom_call.1} parent=27 // pred_check
          %p158 = pneg %p51
        $region30: #{tpu_custom_call.1} parent=27 // pred_check_branch
          %160 = sbr.rel (%p158) target = $region32
        $region31: #{tpu_custom_call.1} parent=27 // pred_region
          %161 = dma.done %s154, 384
        $region32: #{tpu_custom_call.1} parent=27 // pred_fallthru
          _
        // Predicated region
        $region33: #{tpu_custom_call.1} parent=27 // pred_check
          %p162 = pneg %p72
        $region34: #{tpu_custom_call.1} parent=27 // pred_check_branch
          %164 = sbr.rel (%p162) target = $region36
        $region35: #{tpu_custom_call.1} parent=27 // pred_region
          %165 = dma.done [#allocation9], 384
        $region36: #{tpu_custom_call.1} parent=27 // pred_fallthru
          _
        %s166 = sand.u32 %s38, 1
        %s167 = scalar_lea.sflag [#allocation6], %s166
        %s168 = sand.u32 %s38, 1
        %s169 = smul.addr %s168, 24
        %s170 = scalar_lea.vmem [#allocation5], %s169
        %p171 = pneg %p51
        %p172 = pneg %p48
        %p173 = pneg %p72
        %p174 = pneg %p69
        %p175 = pneg %p93
        %p176 = pneg %p90
        %v177 = vld [vmem:[%s157] sm:$0xff]
        %v178 = vld [vmem:[%s157 + $0x8] sm:$0xff]
        %v179 = vld [vmem:[%s157 + $0x10] sm:$0xff]
        %p180 = scmp.eq.s32.totalorder %s22, 0
        // Predicated region
        $region37: #{tpu_custom_call.1} parent=27 // pred_check
          %p181 = pneg %p180
        $region38: #{tpu_custom_call.1} parent=27 // pred_check_branch
          %183 = sbr.rel (%p181) target = $region40
        $region39: #{tpu_custom_call.1} parent=27 // pred_region
          %p184 = scmp.eq.s32.totalorder %s23, 0
          // Predicated region
          $region41: #{tpu_custom_call.1} parent=39 // pred_check
            %p185 = pneg %p184
          $region42: #{tpu_custom_call.1} parent=39 // pred_check_branch
            %187 = sbr.rel (%p185) target = $region44
          $region43: #{tpu_custom_call.1} parent=39 // pred_region
            %188 = vst [vmem:[#allocation2] sm:$0xff] %v177
            %189 = vst [vmem:[#allocation2 + $0x8] sm:$0xff] %v178
            %190 = vst [vmem:[#allocation2 + $0x10] sm:$0xff] %v179
            %191 = vst [vmem:[#allocation3] sm:$0xff] 1.0
            %192 = vst [vmem:[#allocation3 + $0x8] sm:$0xff] 1.0
            %193 = vst [vmem:[#allocation3 + $0x10] sm:$0xff] 1.0
            %s194 = scalar_lea.smem [#allocation4], 0
            %195 = sst [smem:[%s194]] 0.0
            %s196 = scalar_lea.smem [#allocation4], 1
            %197 = sst [smem:[%s196]] 0.0
            %s198 = scalar_lea.smem [#allocation4], 2
            %199 = sst [smem:[%s198]] 0.0
          $region44: #{tpu_custom_call.1} parent=39 // pred_fallthru
            _
          %p200 = scmp.gt.s32.totalorder %s23, 0
          // Predicated region
          $region45: #{tpu_custom_call.1} parent=39 // pred_check
            %p201 = pneg %p200
          $region46: #{tpu_custom_call.1} parent=39 // pred_check_branch
            %203 = sbr.rel (%p201) target = $region48
          $region47: #{tpu_custom_call.1} parent=39 // pred_region
            %v204 = vld [vmem:[#allocation2] sm:$0xff]
            %v205 = vld [vmem:[#allocation2 + $0x8] sm:$0xff]
            %v206 = vld [vmem:[#allocation2 + $0x10] sm:$0xff]
            %v207 = vmax.f32 %v204, %v177
            %v208 = vmax.f32 %v205, %v178
            %v209 = vmax.f32 %v206, %v179
            %v210 = vld [vmem:[#allocation3] sm:$0xff]
            %v211 = vld [vmem:[#allocation3 + $0x8] sm:$0xff]
            %v212 = vld [vmem:[#allocation3 + $0x10] sm:$0xff]
            %v213 = vsub.f32 %v204, %v207
            %v214 = vsub.f32 %v205, %v208
            %v215 = vsub.f32 %v206, %v209
            %v216 = vmul.f32 %v213, 1.442695
            %v217 = vpow.pop %v216
            %v218 = vmul.f32 %v214, 1.442695
            %v219 = vpow.pop %v218
            %v220 = vmul.f32 %v215, 1.442695
            %v221 = vpow.pop %v220
            %v222 = vmul.f32 %v210, %v217
            %v223 = vmul.f32 %v211, %v219
            %v224 = vmul.f32 %v212, %v221
            %v225 = vsub.f32 %v177, %v207
            %v226 = vsub.f32 %v178, %v208
            %v227 = vsub.f32 %v179, %v209
            %v228 = vmul.f32 %v225, 1.442695
            %v229 = vpow.pop %v228
            %v230 = vmul.f32 %v226, 1.442695
            %v231 = vpow.pop %v230
            %v232 = vmul.f32 %v227, 1.442695
            %v233 = vpow.pop %v232
            %v234 = vadd.f32 %v222, %v229
            %v235 = vadd.f32 %v223, %v231
            %v236 = vadd.f32 %v224, %v233
            %237 = vst [vmem:[#allocation3] sm:$0xff] %v234
            %238 = vst [vmem:[#allocation3 + $0x8] sm:$0xff] %v235
            %239 = vst [vmem:[#allocation3 + $0x10] sm:$0xff] %v236
            %240 = vst [vmem:[#allocation2] sm:$0xff] %v207
            %241 = vst [vmem:[#allocation2 + $0x8] sm:$0xff] %v208
            %242 = vst [vmem:[#allocation2 + $0x10] sm:$0xff] %v209
          $region48: #{tpu_custom_call.1} parent=39 // pred_fallthru
            _
          %p243 = scmp.eq.s32.totalorder %s23, 3
          // Predicated region
          $region49: #{tpu_custom_call.1} parent=39 // pred_check
            %p244 = pneg %p243
          $region50: #{tpu_custom_call.1} parent=39 // pred_check_branch
            %246 = sbr.rel (%p244) target = $region52
          $region51: #{tpu_custom_call.1} parent=39 // pred_region
            %v247 = vld [vmem:[#allocation2] sm:$0xff]
            %v248 = vld [vmem:[#allocation2 + $0x8] sm:$0xff]
            %v249 = vld [vmem:[#allocation2 + $0x10] sm:$0xff]
            %v250 = vld [vmem:[#allocation3] sm:$0xff]
            %v251 = vld [vmem:[#allocation3 + $0x8] sm:$0xff]
            %v252 = vld [vmem:[#allocation3 + $0x10] sm:$0xff]
            %v253 = vlog2.pop %v250
            %v254 = vmul.f32 %v253, 0.6931472
            %v255 = vlog2.pop %v251
            %v256 = vmul.f32 %v255, 0.6931472
            %v257 = vlog2.pop %v252
            %v258 = vmul.f32 %v257, 0.6931472
            %v259 = vadd.f32 %v247, %v254
            %v260 = vadd.f32 %v248, %v256
            %v261 = vadd.f32 %v249, %v258
            %262 = vst [vmem:[#allocation2] sm:$0xff] %v259
            %263 = vst [vmem:[#allocation2 + $0x8] sm:$0xff] %v260
            %264 = vst [vmem:[#allocation2 + $0x10] sm:$0xff] %v261
          $region52: #{tpu_custom_call.1} parent=39 // pred_fallthru
            _
        $region40: #{tpu_custom_call.1} parent=27 // pred_fallthru
          _
        %p265 = scmp.eq.s32.totalorder %s22, 1
        // Predicated region
        $region53: #{tpu_custom_call.1} parent=27 // pred_check
          %p266 = pneg %p265
        $region54: #{tpu_custom_call.1} parent=27 // pred_check_branch
          %268 = sbr.rel (%p266) target = $region56
        $region55: #{tpu_custom_call.1} parent=27 // pred_region
          %v269 = vlaneseq
          %v270 = vshrl.u32 %v269, 7
          %v271 = vadd.s32 %v270, 8
          %v272 = vadd.s32 %v270, 16
          %v273 = vlaneseq
          %v274 = vand.u32 %v273, 127
          %vm275 = vcmp.lt.s32.totalorder %v270, 16
          %vm276 = vcmp.lt.s32.totalorder %v271, 16
          %vm277 = vcmp.lt.s32.totalorder %v272, 16
          %vm278 = vcmp.lt.s32.totalorder %v274, 16
          %vm279 = vmand %vm275, %vm278
          %vm280 = vmand %vm276, %vm278
          %vm281 = vmand %vm277, %vm278
          %v282 = vsel %vm279, 1, 0
          %v283 = vsel %vm280, 1, 0
          %v284 = vsel %vm281, 1, 0
          %v285 = vcvt.s32.f32 %v282
          %v286 = vcvt.s32.f32 %v283
          %v287 = vcvt.s32.f32 %v284
          %v288 = vld [vmem:[#allocation8] sm:$0xff]
          %v289 = vld [vmem:[#allocation8 + $0x8] sm:$0xff]
          %v290 = vld [vmem:[#allocation8 + $0x10] sm:$0xff]
          %vm291 = vcmp.ne.s32.totalorder %v288, 255
          %vm292 = vcmp.ne.s32.totalorder %v289, 255
          %vm293 = vcmp.ne.s32.totalorder %v290, 255
          %v294 = vsel %vm291, 1, 0
          %v295 = vsel %vm292, 1, 0
          %v296 = vsel %vm293, 1, 0
          %v297 = vcvt.s32.f32 %v294
          %v298 = vcvt.s32.f32 %v295
          %v299 = vcvt.s32.f32 %v296
          %v300 = vstv %s23
          %vm301 = vcmp.eq.s32.totalorder %v288, %v300
          %vm302 = vcmp.eq.s32.totalorder %v289, %v300
          %vm303 = vcmp.eq.s32.totalorder %v290, %v300
          %v304 = vsel %vm301, 1, 0
          %v305 = vsel %vm302, 1, 0
          %v306 = vsel %vm303, 1, 0
          %v307 = vcvt.s32.f32 %v304
          %v308 = vcvt.s32.f32 %v305
          %v309 = vcvt.s32.f32 %v306
          %v310 = vld [vmem:[#allocation2] sm:$0xff]
          %v311 = vld [vmem:[#allocation2 + $0x8] sm:$0xff]
          %v312 = vld [vmem:[#allocation2 + $0x10] sm:$0xff]
          %v313 = vsub.f32 %v177, %v310
          %v314 = vsub.f32 %v178, %v311
          %v315 = vsub.f32 %v179, %v312
          %v316 = vmul.f32 %v313, 1.442695
          %v317 = vpow.pop %v316
          %v318 = vmul.f32 %v314, 1.442695
          %v319 = vpow.pop %v318
          %v320 = vmul.f32 %v315, 1.442695
          %v321 = vpow.pop %v320
          %v322 = vsub.f32 0.0, %v313
          %v323 = vsub.f32 0.0, %v314
          %v324 = vsub.f32 0.0, %v315
          %v325 = vmul.f32 %v307, %v322
          %v326 = vmul.f32 %v308, %v323
          %v327 = vmul.f32 %v309, %v324
          %v328 = vadd.f32 %v325, %v326
          %v329 = vadd.f32 %v328, %v327
          %330 = vadd.xlane.f32.xlu0 %v329
          %v331 = vpop.xlane.xlu0 %330
          %v332 = vrot.slane %v331, 4
          %v333 = vadd.f32 %v331, %v332
          %v334 = vrot.slane %v333, 2
          %v335 = vadd.f32 %v333, %v334
          %v336 = vrot.slane %v335, 1
          %v337 = vadd.f32 %v335, %v336
          %s338 = vtos %v337
          %v339 = vmul.f32 %v317, %v307
          %v340 = vmul.f32 %v319, %v308
          %v341 = vmul.f32 %v321, %v309
          %v342 = vadd.f32 %v339, %v340
          %v343 = vadd.f32 %v342, %v341
          %344 = vadd.xlane.f32.xlu0 %v343
          %v345 = vpop.xlane.xlu0 %344
          %v346 = vrot.slane %v345, 4
          %v347 = vadd.f32 %v345, %v346
          %v348 = vrot.slane %v347, 2
          %v349 = vadd.f32 %v347, %v348
          %v350 = vrot.slane %v349, 1
          %v351 = vadd.f32 %v349, %v350
          %s352 = vtos %v351
          %v353 = vmul.f32 %v297, %v317
          %v354 = vmul.f32 %v298, %v319
          %v355 = vmul.f32 %v299, %v321
          %v356 = vadd.f32 %v353, %v354
          %v357 = vadd.f32 %v356, %v355
          %358 = vadd.xlane.f32.xlu0 %v357
          %v359 = vpop.xlane.xlu0 %358
          %v360 = vrot.slane %v359, 4
          %v361 = vadd.f32 %v359, %v360
          %v362 = vrot.slane %v361, 2
          %v363 = vadd.f32 %v361, %v362
          %v364 = vrot.slane %v363, 1
          %v365 = vadd.f32 %v363, %v364
          %s366 = vtos %v365
          %v367 = vadd.f32 %v307, %v308
          %v368 = vadd.f32 %v367, %v309
          %369 = vadd.xlane.f32.xlu0 %v368
          %v370 = vpop.xlane.xlu0 %369
          %v371 = vrot.slane %v370, 4
          %v372 = vadd.f32 %v370, %v371
          %v373 = vrot.slane %v372, 2
          %v374 = vadd.f32 %v372, %v373
          %v375 = vrot.slane %v374, 1
          %v376 = vadd.f32 %v374, %v375
          %s377 = vtos %v376
          %s378 = smul.f32 %s352, 2.0
          %s379 = sadd.f32 %s378, 1e-06
          %s380 = sadd.f32 %s366, %s377
          %s381 = sadd.f32 %s380, 1e-06
          %v382 = vstv %s381
          %v383 = vrcp.pop %v382
          %s384 = vtos %v383
          %s385 = smul.f32 %s379, %s384
          %s386 = ssub.f32 1.0, %s385
          %v387 = vrot.slane %v307, 7
          %v388 = vrot.slane %v308, 7
          %v389 = vrot.slane %v309, 7
          %vm390 = vcmp.lt.s32.totalorder %v270, 1
          %v391 = vsel %vm390, %v388, %v389
          %v392 = vsel %vm390, %v387, %v388
          %v393 = vsel %vm390, %v389, %v387
          %v394 = vmul.f32 %v307, 2.0
          %v395 = vmul.f32 %v308, 2.0
          %v396 = vmul.f32 %v309, 2.0
          %v397 = vadd.f32 %v393, %v394
          %v398 = vadd.f32 %v392, %v395
          %v399 = vadd.f32 %v391, %v396
          %v400 = vrot.slane %v307, 1
          %v401 = vrot.slane %v308, 1
          %v402 = vrot.slane %v309, 1
          %vm403 = vcmp.lt.s32.totalorder %v270, 7
          %v404 = vsel %vm403, %v401, %v402
          %v405 = vsel %vm403, %v400, %v401
          %v406 = vsel %vm403, %v402, %v400
          %v407 = vadd.f32 %v397, %v405
          %v408 = vadd.f32 %v398, %v404
          %v409 = vadd.f32 %v399, %v406
          %410 = vrot.lane.b32.xlu0 %v407, 1
          %v411 = vpop.permute.xlu0 %410
          %412 = vrot.lane.b32.xlu0 %v408, 1
          %v413 = vpop.permute.xlu0 %412
          %414 = vrot.lane.b32.xlu0 %v409, 1
          %v415 = vpop.permute.xlu0 %414
          %416 = vrot.lane.b32.xlu0 %v407, 127
          %v417 = vpop.permute.xlu0 %416
          %418 = vrot.lane.b32.xlu0 %v408, 127
          %v419 = vpop.permute.xlu0 %418
          %420 = vrot.lane.b32.xlu0 %v409, 127
          %v421 = vpop.permute.xlu0 %420
          %v422 = vsub.f32 %v411, %v417
          %v423 = vsub.f32 %v413, %v419
          %v424 = vsub.f32 %v415, %v421
          %425 = vrot.lane.b32.xlu0 %v307, 1
          %v426 = vpop.permute.xlu0 %425
          %427 = vrot.lane.b32.xlu0 %v308, 1
          %v428 = vpop.permute.xlu0 %427
          %429 = vrot.lane.b32.xlu0 %v309, 1
          %v430 = vpop.permute.xlu0 %429
          %v431 = vadd.f32 %v426, %v394
          %v432 = vadd.f32 %v428, %v395
          %v433 = vadd.f32 %v430, %v396
          %434 = vrot.lane.b32.xlu0 %v307, 127
          %v435 = vpop.permute.xlu0 %434
          %436 = vrot.lane.b32.xlu0 %v308, 127
          %v437 = vpop.permute.xlu0 %436
          %438 = vrot.lane.b32.xlu0 %v309, 127
          %v439 = vpop.permute.xlu0 %438
          %v440 = vadd.f32 %v431, %v435
          %v441 = vadd.f32 %v432, %v437
          %v442 = vadd.f32 %v433, %v439
          %v443 = vrot.slane %v440, 7
          %v444 = vrot.slane %v441, 7
          %v445 = vrot.slane %v442, 7
          %v446 = vsel %vm390, %v444, %v445
          %v447 = vsel %vm390, %v443, %v444
          %v448 = vsel %vm390, %v445, %v443
          %v449 = vrot.slane %v440, 1
          %v450 = vrot.slane %v441, 1
          %v451 = vrot.slane %v442, 1
          %v452 = vsel %vm403, %v450, %v451
          %v453 = vsel %vm403, %v449, %v450
          %v454 = vsel %vm403, %v451, %v449
          %v455 = vsub.f32 %v448, %v453
          %v456 = vsub.f32 %v447, %v452
          %v457 = vsub.f32 %v446, %v454
          %v458 = vmul.f32 %v422, %v422
          %v459 = vmul.f32 %v423, %v423
          %v460 = vmul.f32 %v424, %v424
          %v461 = vmul.f32 %v455, %v455
          %v462 = vmul.f32 %v456, %v456
          %v463 = vmul.f32 %v457, %v457
          %v464 = vadd.f32 %v458, %v461
          %v465 = vadd.f32 %v459, %v462
          %v466 = vadd.f32 %v460, %v463
          %v467 = vrsqrt.pop %v464
          %v468 = vmul.f32 %v464, %v467
          %vm469 = vcmp.eq.f32.partialorder %v464, inf
          %v470 = vsel %vm469, %v464, %v468
          %vm471 = vcmp.eq.f32.partialorder %v464, 0.0
          %v472 = vand.u32 %v464, 2147483648
          %v473 = vsel %vm471, %v472, %v470
          %v474 = vrsqrt.pop %v465
          %v475 = vmul.f32 %v465, %v474
          %vm476 = vcmp.eq.f32.partialorder %v465, inf
          %v477 = vsel %vm476, %v465, %v475
          %vm478 = vcmp.eq.f32.partialorder %v465, 0.0
          %v479 = vand.u32 %v465, 2147483648
          %v480 = vsel %vm478, %v479, %v477
          %v481 = vrsqrt.pop %v466
          %v482 = vmul.f32 %v466, %v481
          %vm483 = vcmp.eq.f32.partialorder %v466, inf
          %v484 = vsel %vm483, %v466, %v482
          %vm485 = vcmp.eq.f32.partialorder %v466, 0.0
          %v486 = vand.u32 %v466, 2147483648
          %v487 = vsel %vm485, %v486, %v484
          %v488 = vsel %vm279, %v473, 3.4e+38
          %v489 = vsel %vm280, %v480, 3.4e+38
          %v490 = vsel %vm281, %v487, 3.4e+38
          %v491 = vmin.f32 %v488, %v489
          %v492 = vmin.f32 %v491, %v490
          %493 = vmin.xlane.f32.xlu0 %v492
          %v494 = vpop.xlane.xlu0 %493
          %v495 = vrot.slane %v494, 4
          %v496 = vmin.f32 %v494, %v495
          %v497 = vrot.slane %v496, 2
          %v498 = vmin.f32 %v496, %v497
          %v499 = vrot.slane %v498, 1
          %v500 = vmin.f32 %v498, %v499
          %s501 = vtos %v500
          %v502 = vsel %vm279, %v473, -3.4e+38
          %v503 = vsel %vm280, %v480, -3.4e+38
          %v504 = vsel %vm281, %v487, -3.4e+38
          %v505 = vmax.f32 %v502, %v503
          %v506 = vmax.f32 %v505, %v504
          %507 = vmax.xlane.f32.xlu0 %v506
          %v508 = vpop.xlane.xlu0 %507
          %v509 = vrot.slane %v508, 4
          %v510 = vmax.f32 %v508, %v509
          %v511 = vrot.slane %v510, 2
          %v512 = vmax.f32 %v510, %v511
          %v513 = vrot.slane %v512, 1
          %v514 = vmax.f32 %v512, %v513
          %s515 = vtos %v514
          %v516 = vstv %s501
          %v517 = vsub.f32 %v473, %v516
          %v518 = vsub.f32 %v480, %v516
          %v519 = vsub.f32 %v487, %v516
          %s520 = ssub.f32 %s515, %s501
          %s521 = sadd.f32 %s520, 1e-06
          %v522 = vstv %s521
          %v523 = vrcp.pop %v522
          %s524 = vtos %v523
          %v525 = vstv %s524
          %v526 = vmul.f32 %v517, %v525
          %v527 = vmul.f32 %v518, %v525
          %v528 = vmul.f32 %v519, %v525
          %v529 = vmul.f32 %v317, %v285
          %v530 = vmul.f32 %v319, %v286
          %v531 = vmul.f32 %v321, %v287
          %v532 = vrot.slane %v529, 7
          %v533 = vrot.slane %v530, 7
          %v534 = vrot.slane %v531, 7
          %v535 = vsel %vm390, %v533, %v534
          %v536 = vsel %vm390, %v532, %v533
          %v537 = vsel %vm390, %v534, %v532
          %v538 = vmul.f32 %v529, 2.0
          %v539 = vmul.f32 %v530, 2.0
          %v540 = vmul.f32 %v531, 2.0
          %v541 = vadd.f32 %v537, %v538
          %v542 = vadd.f32 %v536, %v539
          %v543 = vadd.f32 %v535, %v540
          %v544 = vrot.slane %v529, 1
          %v545 = vrot.slane %v530, 1
          %v546 = vrot.slane %v531, 1
          %v547 = vsel %vm403, %v545, %v546
          %v548 = vsel %vm403, %v544, %v545
          %v549 = vsel %vm403, %v546, %v544
          %v550 = vadd.f32 %v541, %v548
          %v551 = vadd.f32 %v542, %v547
          %v552 = vadd.f32 %v543, %v549
          %553 = vrot.lane.b32.xlu0 %v550, 1
          %v554 = vpop.permute.xlu0 %553
          %555 = vrot.lane.b32.xlu0 %v551, 1
          %v556 = vpop.permute.xlu0 %555
          %557 = vrot.lane.b32.xlu0 %v552, 1
          %v558 = vpop.permute.xlu0 %557
          %559 = vrot.lane.b32.xlu0 %v550, 127
          %v560 = vpop.permute.xlu0 %559
          %561 = vrot.lane.b32.xlu0 %v551, 127
          %v562 = vpop.permute.xlu0 %561
          %563 = vrot.lane.b32.xlu0 %v552, 127
          %v564 = vpop.permute.xlu0 %563
          %v565 = vsub.f32 %v554, %v560
          %v566 = vsub.f32 %v556, %v562
          %v567 = vsub.f32 %v558, %v564
          %568 = vrot.lane.b32.xlu0 %v529, 1
          %v569 = vpop.permute.xlu0 %568
          %570 = vrot.lane.b32.xlu0 %v530, 1
          %v571 = vpop.permute.xlu0 %570
          %572 = vrot.lane.b32.xlu0 %v531, 1
          %v573 = vpop.permute.xlu0 %572
          %v574 = vadd.f32 %v569, %v538
          %v575 = vadd.f32 %v571, %v539
          %v576 = vadd.f32 %v573, %v540
          %577 = vrot.lane.b32.xlu0 %v529, 127
          %v578 = vpop.permute.xlu0 %577
          %579 = vrot.lane.b32.xlu0 %v530, 127
          %v580 = vpop.permute.xlu0 %579
          %581 = vrot.lane.b32.xlu0 %v531, 127
          %v582 = vpop.permute.xlu0 %581
          %v583 = vadd.f32 %v574, %v578
          %v584 = vadd.f32 %v575, %v580
          %v585 = vadd.f32 %v576, %v582
          %v586 = vrot.slane %v583, 7
          %v587 = vrot.slane %v584, 7
          %v588 = vrot.slane %v585, 7
          %v589 = vsel %vm390, %v587, %v588
          %v590 = vsel %vm390, %v586, %v587
          %v591 = vsel %vm390, %v588, %v586
          %v592 = vrot.slane %v583, 1
          %v593 = vrot.slane %v584, 1
          %v594 = vrot.slane %v585, 1
          %v595 = vsel %vm403, %v593, %v594
          %v596 = vsel %vm403, %v592, %v593
          %v597 = vsel %vm403, %v594, %v592
          %v598 = vsub.f32 %v591, %v596
          %v599 = vsub.f32 %v590, %v595
          %v600 = vsub.f32 %v589, %v597
          %v601 = vmul.f32 %v565, %v565
          %v602 = vmul.f32 %v566, %v566
          %v603 = vmul.f32 %v567, %v567
          %v604 = vmul.f32 %v598, %v598
          %v605 = vmul.f32 %v599, %v599
          %v606 = vmul.f32 %v600, %v600
          %v607 = vadd.f32 %v601, %v604
          %v608 = vadd.f32 %v602, %v605
          %v609 = vadd.f32 %v603, %v606
          %v610 = vrsqrt.pop %v607
          %v611 = vmul.f32 %v607, %v610
          %vm612 = vcmp.eq.f32.partialorder %v607, inf
          %v613 = vsel %vm612, %v607, %v611
          %vm614 = vcmp.eq.f32.partialorder %v607, 0.0
          %v615 = vand.u32 %v607, 2147483648
          %v616 = vsel %vm614, %v615, %v613
          %v617 = vrsqrt.pop %v608
          %v618 = vmul.f32 %v608, %v617
          %vm619 = vcmp.eq.f32.partialorder %v608, inf
          %v620 = vsel %vm619, %v608, %v618
          %vm621 = vcmp.eq.f32.partialorder %v608, 0.0
          %v622 = vand.u32 %v608, 2147483648
          %v623 = vsel %vm621, %v622, %v620
          %v624 = vrsqrt.pop %v609
          %v625 = vmul.f32 %v609, %v624
          %vm626 = vcmp.eq.f32.partialorder %v609, inf
          %v627 = vsel %vm626, %v609, %v625
          %vm628 = vcmp.eq.f32.partialorder %v609, 0.0
          %v629 = vand.u32 %v609, 2147483648
          %v630 = vsel %vm628, %v629, %v627
          %v631 = vsel %vm279, %v616, 3.4e+38
          %v632 = vsel %vm280, %v623, 3.4e+38
          %v633 = vsel %vm281, %v630, 3.4e+38
          %v634 = vmin.f32 %v631, %v632
          %v635 = vmin.f32 %v634, %v633
          %636 = vmin.xlane.f32.xlu0 %v635
          %v637 = vpop.xlane.xlu0 %636
          %v638 = vrot.slane %v637, 4
          %v639 = vmin.f32 %v637, %v638
          %v640 = vrot.slane %v639, 2
          %v641 = vmin.f32 %v639, %v640
          %v642 = vrot.slane %v641, 1
          %v643 = vmin.f32 %v641, %v642
          %s644 = vtos %v643
          %v645 = vsel %vm279, %v616, -3.4e+38
          %v646 = vsel %vm280, %v623, -3.4e+38
          %v647 = vsel %vm281, %v630, -3.4e+38
          %v648 = vmax.f32 %v645, %v646
          %v649 = vmax.f32 %v648, %v647
          %650 = vmax.xlane.f32.xlu0 %v649
          %v651 = vpop.xlane.xlu0 %650
          %v652 = vrot.slane %v651, 4
          %v653 = vmax.f32 %v651, %v652
          %v654 = vrot.slane %v653, 2
          %v655 = vmax.f32 %v653, %v654
          %v656 = vrot.slane %v655, 1
          %v657 = vmax.f32 %v655, %v656
          %s658 = vtos %v657
          %v659 = vstv %s644
          %v660 = vsub.f32 %v616, %v659
          %v661 = vsub.f32 %v623, %v659
          %v662 = vsub.f32 %v630, %v659
          %s663 = ssub.f32 %s658, %s644
          %s664 = sadd.f32 %s663, 1e-06
          %v665 = vstv %s664
          %v666 = vrcp.pop %v665
          %s667 = vtos %v666
          %v668 = vstv %s667
          %v669 = vmul.f32 %v660, %v668
          %v670 = vmul.f32 %v661, %v668
          %v671 = vmul.f32 %v662, %v668
          %v672 = vmax.f32 %v669, 0.0
          %v673 = vmax.f32 %v670, 0.0
          %v674 = vmax.f32 %v671, 0.0
          %v675 = vmin.f32 %v672, 1.0
          %v676 = vmin.f32 %v673, 1.0
          %v677 = vmin.f32 %v674, 1.0
          %v678 = vlog2.pop %v675
          %v679 = vmul.f32 %v678, 0.6931472
          %v680 = vlog2.pop %v676
          %v681 = vmul.f32 %v680, 0.6931472
          %v682 = vlog2.pop %v677
          %v683 = vmul.f32 %v682, 0.6931472
          %v684 = vmax.f32 %v679, -100.0
          %v685 = vmax.f32 %v681, -100.0
          %v686 = vmax.f32 %v683, -100.0
          %v687 = vmul.f32 %v297, %v526
          %v688 = vmul.f32 %v298, %v527
          %v689 = vmul.f32 %v299, %v528
          %v690 = vmul.f32 %v687, %v684
          %v691 = vmul.f32 %v688, %v685
          %v692 = vmul.f32 %v689, %v686
          %v693 = vadd.f32 %v690, %v691
          %v694 = vadd.f32 %v693, %v692
          %695 = vadd.xlane.f32.xlu0 %v694
          %v696 = vpop.xlane.xlu0 %695
          %v697 = vrot.slane %v696, 4
          %v698 = vadd.f32 %v696, %v697
          %v699 = vrot.slane %v698, 2
          %v700 = vadd.f32 %v698, %v699
          %v701 = vrot.slane %v700, 1
          %v702 = vadd.f32 %v700, %v701
          %s703 = vtos %v702
          %v704 = vsub.f32 1.0, %v675
          %v705 = vsub.f32 1.0, %v676
          %v706 = vsub.f32 1.0, %v677
          %v707 = vlog2.pop %v704
          %v708 = vmul.f32 %v707, 0.6931472
          %v709 = vlog2.pop %v705
          %v710 = vmul.f32 %v709, 0.6931472
          %v711 = vlog2.pop %v706
          %v712 = vmul.f32 %v711, 0.6931472
          %v713 = vmax.f32 %v708, -100.0
          %v714 = vmax.f32 %v710, -100.0
          %v715 = vmax.f32 %v712, -100.0
          %v716 = vsub.f32 %v297, %v687
          %v717 = vsub.f32 %v298, %v688
          %v718 = vsub.f32 %v299, %v689
          %v719 = vmul.f32 %v716, %v713
          %v720 = vmul.f32 %v717, %v714
          %v721 = vmul.f32 %v718, %v715
          %v722 = vadd.f32 %v719, %v720
          %v723 = vadd.f32 %v722, %v721
          %724 = vadd.xlane.f32.xlu0 %v723
          %v725 = vpop.xlane.xlu0 %724
          %v726 = vrot.slane %v725, 4
          %v727 = vadd.f32 %v725, %v726
          %v728 = vrot.slane %v727, 2
          %v729 = vadd.f32 %v727, %v728
          %v730 = vrot.slane %v729, 1
          %v731 = vadd.f32 %v729, %v730
          %s732 = vtos %v731
          %s733 = sadd.f32 %s703, %s732
          %s734 = ssub.f32 0.0, %s733
          %s735 = sld [smem:[#allocation4]]
          %s736 = sadd.f32 %s735, %s338
          %s737 = scalar_lea.smem [#allocation4], 0
          %738 = sst [smem:[%s737]] %s736
          %s739 = sld [smem:[#allocation4 + $0x1]]
          %s740 = sadd.f32 %s739, %s386
          %s741 = scalar_lea.smem [#allocation4], 1
          %742 = sst [smem:[%s741]] %s740
          %s743 = sld [smem:[#allocation4 + $0x2]]
          %s744 = sadd.f32 %s743, %s734
          %s745 = scalar_lea.smem [#allocation4], 2
          %746 = sst [smem:[%s745]] %s744
          %p747 = scmp.eq.s32.totalorder %s23, 3
          // Predicated region
          $region57: #{tpu_custom_call.1} parent=55 // pred_check
            %p748 = pneg %p747
          $region58: #{tpu_custom_call.1} parent=55 // pred_check_branch
            %750 = sbr.rel (%p748) target = $region60
          $region59: #{tpu_custom_call.1} parent=55 // pred_region
            %v751 = vadd.f32 %v297, %v298
            %v752 = vadd.f32 %v751, %v299
            %753 = vadd.xlane.f32.xlu0 %v752
            %v754 = vpop.xlane.xlu0 %753
            %v755 = vrot.slane %v754, 4
            %v756 = vadd.f32 %v754, %v755
            %v757 = vrot.slane %v756, 2
            %v758 = vadd.f32 %v756, %v757
            %v759 = vrot.slane %v758, 1
            %v760 = vadd.f32 %v758, %v759
            %s761 = vtos %v760
            %s762 = smax.f32 %s761, 1.0
            %v763 = vstv %s762
            %v764 = vrcp.pop %v763
            %s765 = vtos %v764
            %s766 = sld [smem:[#allocation4]]
            %s767 = smul.f32 %s766, %s765
            %s768 = sld [smem:[#allocation4 + $0x1]]
            %s769 = smul.f32 %s768, 0.25
            %s770 = sld [smem:[#allocation4 + $0x2]]
            %s771 = smul.f32 %s770, %s765
            %s772 = smul.f32 %s771, 0.25
            %s773 = smul.f32 %s769, 0.5
            %s774 = sadd.f32 %s767, %s773
            %s775 = smul.f32 %s772, 0.5
            %s776 = sadd.f32 %s774, %s775
            %s777 = scalar_lea.smem [#allocation10], 0
            %778 = sst [smem:[%s777]] %s776
          $region60: #{tpu_custom_call.1} parent=55 // pred_fallthru
            _
        $region56: #{tpu_custom_call.1} parent=27 // pred_fallthru
          _
        // Predicated region
        $region61: #{tpu_custom_call.1} parent=27 // pred_check
          %p779 = pneg %p90
        $region62: #{tpu_custom_call.1} parent=27 // pred_check_branch
          %781 = sbr.rel (%p779) target = $region64
        $region63: #{tpu_custom_call.1} parent=27 // pred_region
          %s783 = ssub.s32 16, 16
          %784 = vsyncadd [#allocation7], %s783
          %787 = dma.smem_to_hbm [#allocation10], 16, %s2, [#allocation7]
        $region64: #{tpu_custom_call.1} parent=27 // pred_fallthru
          _
        // Predicated region
        $region65: #{tpu_custom_call.1} parent=27 // pred_check
          %p788 = pneg %p90
        $region66: #{tpu_custom_call.1} parent=27 // pred_check_branch
          %790 = sbr.rel (%p788) target = $region68
        $region67: #{tpu_custom_call.1} parent=27 // pred_region
          %791 = dma.done [#allocation7], 16
        $region68: #{tpu_custom_call.1} parent=27 // pred_fallthru
          _
        %792 = sfence
      $region28: #{tpu_custom_call.1} parent=5 // pred_fallthru
        _
      %p793 = scmp.le.s32.totalorder 2, %s13
      // Predicated region
      $region69: #{tpu_custom_call.1} parent=5 // pred_check
        %p794 = pneg %p793
      $region70: #{tpu_custom_call.1} parent=5 // pred_check_branch
        %796 = sbr.rel (%p794) target = $region72
      $region71: #{tpu_custom_call.1} parent=5 // pred_region
        %s797 = ssub.s32 %s13, 2
      $region72: #{tpu_custom_call.1} parent=5 // pred_fallthru
        _
    $region6: #{tpu_custom_call.1} parent=1 // loop_footer
      %s17 = sadd.s32 1, %s13
    $region7: #{tpu_custom_call.1} parent=1 // loop_footer_branch
      %12 = sbr.rel target = $region3
    $region8: #{tpu_custom_call.1} parent=1 // loop_exit
      _
    %798 = vsyncpa [#allocation6], 1
    %s799 = scalar_lea.sflag [#allocation6], 1
    %800 = vsyncpa %s799, 1
    %801 = vsyncpa [#allocation9], 1
    %802 = vsyncpa [#allocation7], 1
    %s803 = scalar_lea.sflag [#allocation7], 1
    %804 = vsyncpa %s803, 1

</llo_original>
